<compile_context>
chip_gen: v7x
topology: tpu7x:2x2x1
jax: 0.10.0
libtpu: 0.0.40
codegen_flags: <defaults>
</compile_context>

<pallas_src>
import math

import jax
import jax.numpy as jnp
from jax.experimental import pallas as pl
from jax.experimental.pallas import tpu as pltpu


def _bilinear_kernel(x_ref, z_ref, w_ref, b_ref, out_ref):
    # x_ref: (TB, in1) f32   z_ref: (TB, in2) f32
    # w_ref: (in1, in2*out) bf16 (fused, pre-transposed weight)
    # b_ref: (1, out) f32    out_ref: (TB, out) f32
    tb = x_ref.shape[0]
    out_w = out_ref.shape[-1]     # out_features (multiple of 128 in the demo)
    j_dim = z_ref.shape[-1]       # in2_features

    x = x_ref[...].astype(w_ref.dtype)      # bf16 LHS for native MXU rate
    z = z_ref[...].astype(jnp.float32)      # kept f32 for the second contraction

    # One fused MXU matmul over the in1 contraction:
    #   t[b, j*out + o] = sum_i x[b, i] * W[o, i, j]
    t = jnp.dot(x, w_ref[...], preferred_element_type=jnp.float32)  # (TB, in2*out)

    # Second contraction (over in2): unrolled, lane-aligned FMAs on the VPU.
    # Seed the accumulator with the broadcast bias (folds the "+ bias" in).
    acc = jnp.broadcast_to(b_ref[...], (tb, out_w)).astype(jnp.float32)
    for j in range(j_dim):
        acc = acc + z[:, j:j + 1] * t[:, j * out_w:(j + 1) * out_w]

    out_ref[...] = acc.astype(out_ref.dtype)


def bilinear_pallas(x, z, weight, bias, *, block_rows=None):
    """Pallas forward of TorchBilinearCustomized.

    x: (B, in1) f32, z: (B, in2) f32,
    weight: (out, in1, in2) f32 (PyTorch layout), bias: (out,) f32.
    Returns (B, out) (or (B,) when out_features == 1, matching torch's squeeze).
    """
    B, in1 = x.shape
    Bz, in2 = z.shape
    out_f = weight.shape[0]
    assert Bz == B and weight.shape == (out_f, in1, in2) and bias.shape == (out_f,)

    # Host-side param prep (one fused weight, one bias row -> 4 input DMAs total).
    # W_f[i, j*out + o] = W[o, i, j]; stored bf16 for MXU input rate & half DMA.
    w_f = jnp.transpose(weight, (1, 2, 0)).reshape(in1, in2 * out_f)
    w_f = w_f.astype(jnp.bfloat16)
    b2 = bias.reshape(1, out_f).astype(jnp.float32)

    # Grid collapse: whole batch in one step when it fits; big tiles otherwise.
    if block_rows is None:
        if B <= 1024:
            block_rows = B
        else:
            block_rows = next(
                (c for c in (1024, 512, 256, 128, 64, 32, 16, 8) if B % c == 0), B)
    assert B % block_rows == 0
    grid = (B // block_rows,)

    out = pl.pallas_call(
        _bilinear_kernel,
        out_shape=jax.ShapeDtypeStruct((B, out_f), jnp.float32),
        grid=grid,
        in_specs=[
            pl.BlockSpec((block_rows, in1), lambda i: (i, 0)),
            pl.BlockSpec((block_rows, in2), lambda i: (i, 0)),
            pl.BlockSpec((in1, in2 * out_f), lambda i: (0, 0)),   # replicated weight
            pl.BlockSpec((1, out_f), lambda i: (0, 0)),           # replicated bias
        ],
        out_specs=pl.BlockSpec((block_rows, out_f), lambda i: (i, 0)),
        compiler_params=pltpu.CompilerParams(dimension_semantics=("parallel",)),
    )(x, z, w_f, b2)

    # torch: out.squeeze(-1) -> only changes shape when out_features == 1.
    if out_f == 1:
        out = out[:, 0]
    return out


def bilinear_ref(x, z, weight, bias):
    """Pure-JAX f32 reference of the PyTorch forward."""
    out = jnp.einsum('bi,oij,bj->bo', x, weight, z) + bias
    if weight.shape[0] == 1:
        out = out[:, 0]
    return out


if __name__ == "__main__":
    B, IN1, IN2, OUT = 8, 32, 32, 128   # small shapes; OUT multiple of 128 lanes

    key = jax.random.PRNGKey(0)
    kx, kz, kw, kb = jax.random.split(key, 4)
    x = jax.random.normal(kx, (B, IN1), jnp.float32)
    z = jax.random.normal(kz, (B, IN2), jnp.float32)

    # Same init scheme as the module: U(-1/sqrt(in1), 1/sqrt(in1)).
    bound = 1.0 / math.sqrt(IN1)
    weight = jax.random.uniform(kw, (OUT, IN1, IN2), jnp.float32, -bound, bound)
    bias = jax.random.uniform(kb, (OUT,), jnp.float32, -bound, bound)

    out = bilinear_pallas(x, z, weight, bias)
    out = jax.block_until_ready(out)
    assert out.shape == (B, OUT)

    # Tight check vs. a reference that applies the same bf16 quantization the
    # kernel uses on the MXU operands (bf16 storage is a perf choice, not a
    # semantic change).
    xq = x.astype(jnp.bfloat16).astype(jnp.float32)
    wq = weight.astype(jnp.bfloat16).astype(jnp.float32)
    ref_q = jnp.einsum('bi,oij,bj->bo', xq, wq, z) + bias
    assert jnp.allclose(out, ref_q, rtol=1e-3, atol=1e-3), "mismatch vs bf16-quantized reference"

    # Loose check vs. the full-f32 torch-equivalent forward (bf16 rounding only).
    ref = bilinear_ref(x, z, weight, bias)
    assert jnp.allclose(out, ref, rtol=5e-2, atol=2.5e-1), "mismatch vs f32 reference"

    print("KERNEL_OK")
</pallas_src>

<mosaic_0001>
module attributes {stable_mosaic.version = 11 : i64} {
  func.func @_bilinear_kernel(%arg0: i32, %arg1: memref<8x32xf32, #tpu.memory_space<vmem>>, %arg2: memref<8x32xf32, #tpu.memory_space<vmem>>, %arg3: memref<32x4096xbf16, #tpu.memory_space<vmem>>, %arg4: memref<1x128xf32, #tpu.memory_space<vmem>>, %arg5: memref<8x128xf32, #tpu.memory_space<vmem>>) attributes {dimension_semantics = [#tpu.dimension_semantics<parallel>], iteration_bounds = array<i64: 1>, scalar_prefetch = 0 : i64, scratch_operands = 0 : i64, tpu.core_type = #tpu.core_type<tc>, window_params = [{transform_indices = @transform_0, window_bounds = array<i64: 8, 32>}, {transform_indices = @transform_1, window_bounds = array<i64: 8, 32>}, {pipeline_mode = #tpu.pipeline_mode<synchronous>, transform_indices = @transform_2, window_bounds = array<i64: 32, 4096>}, {pipeline_mode = #tpu.pipeline_mode<synchronous>, transform_indices = @transform_3, window_bounds = array<i64: 1, 128>}, {transform_indices = @transform_4, window_bounds = array<i64: 8, 128>}]} {
    %c0 = arith.constant 0 : index
    %c0_0 = arith.constant 0 : index
    %0 = vector.load %arg1[%c0, %c0_0] : memref<8x32xf32, #tpu.memory_space<vmem>>, vector<8x32xf32>
    %1 = arith.truncf %0 : vector<8x32xf32> to vector<8x32xbf16>
    %c0_1 = arith.constant 0 : index
    %c0_2 = arith.constant 0 : index
    %2 = vector.load %arg2[%c0_1, %c0_2] : memref<8x32xf32, #tpu.memory_space<vmem>>, vector<8x32xf32>
    %c0_3 = arith.constant 0 : index
    %c0_4 = arith.constant 0 : index
    %3 = vector.load %arg3[%c0_3, %c0_4] : memref<32x4096xbf16, #tpu.memory_space<vmem>>, vector<32x4096xbf16>
    %cst = arith.constant dense<0.000000e+00> : vector<8x4096xf32>
    %4 = tpu.matmul %1, %3, %cst {dimension_numbers = #tpu.dot_dimension_numbers<[1], [0], [0], [1], [0, 0, 1, 1], [], []>} : vector<8x32xbf16>, vector<32x4096xbf16>, vector<8x4096xf32> -> vector<8x4096xf32>
    %c0_5 = arith.constant 0 : index
    %c0_6 = arith.constant 0 : index
    %5 = vector.load %arg4[%c0_5, %c0_6] : memref<1x128xf32, #tpu.memory_space<vmem>>, vector<1x128xf32>
    %6 = vector.shape_cast %5 : vector<1x128xf32> to vector<1x128xf32>
    %7 = vector.broadcast %6 : vector<1x128xf32> to vector<8x128xf32>
    %8 = vector.extract_strided_slice %2 {offsets = [0, 0], sizes = [8, 1], strides = [1, 1]} : vector<8x32xf32> to vector<8x1xf32>
    %9 = vector.extract_strided_slice %4 {offsets = [0, 0], sizes = [8, 128], strides = [1, 1]} : vector<8x4096xf32> to vector<8x128xf32>
    %10 = vector.broadcast %8 : vector<8x1xf32> to vector<8x128xf32>
    %11 = arith.mulf %10, %9 : vector<8x128xf32>
    %12 = arith.addf %7, %11 : vector<8x128xf32>
    %13 = vector.extract_strided_slice %2 {offsets = [0, 1], sizes = [8, 1], strides = [1, 1]} : vector<8x32xf32> to vector<8x1xf32>
    %14 = vector.extract_strided_slice %4 {offsets = [0, 128], sizes = [8, 128], strides = [1, 1]} : vector<8x4096xf32> to vector<8x128xf32>
    %15 = vector.broadcast %13 : vector<8x1xf32> to vector<8x128xf32>
    %16 = arith.mulf %15, %14 : vector<8x128xf32>
    %17 = arith.addf %12, %16 : vector<8x128xf32>
    %18 = vector.extract_strided_slice %2 {offsets = [0, 2], sizes = [8, 1], strides = [1, 1]} : vector<8x32xf32> to vector<8x1xf32>
    %19 = vector.extract_strided_slice %4 {offsets = [0, 256], sizes = [8, 128], strides = [1, 1]} : vector<8x4096xf32> to vector<8x128xf32>
    %20 = vector.broadcast %18 : vector<8x1xf32> to vector<8x128xf32>
    %21 = arith.mulf %20, %19 : vector<8x128xf32>
    %22 = arith.addf %17, %21 : vector<8x128xf32>
    %23 = vector.extract_strided_slice %2 {offsets = [0, 3], sizes = [8, 1], strides = [1, 1]} : vector<8x32xf32> to vector<8x1xf32>
    %24 = vector.extract_strided_slice %4 {offsets = [0, 384], sizes = [8, 128], strides = [1, 1]} : vector<8x4096xf32> to vector<8x128xf32>
    %25 = vector.broadcast %23 : vector<8x1xf32> to vector<8x128xf32>
    %26 = arith.mulf %25, %24 : vector<8x128xf32>
    %27 = arith.addf %22, %26 : vector<8x128xf32>
    %28 = vector.extract_strided_slice %2 {offsets = [0, 4], sizes = [8, 1], strides = [1, 1]} : vector<8x32xf32> to vector<8x1xf32>
    %29 = vector.extract_strided_slice %4 {offsets = [0, 512], sizes = [8, 128], strides = [1, 1]} : vector<8x4096xf32> to vector<8x128xf32>
    %30 = vector.broadcast %28 : vector<8x1xf32> to vector<8x128xf32>
    %31 = arith.mulf %30, %29 : vector<8x128xf32>
    %32 = arith.addf %27, %31 : vector<8x128xf32>
    %33 = vector.extract_strided_slice %2 {offsets = [0, 5], sizes = [8, 1], strides = [1, 1]} : vector<8x32xf32> to vector<8x1xf32>
    %34 = vector.extract_strided_slice %4 {offsets = [0, 640], sizes = [8, 128], strides = [1, 1]} : vector<8x4096xf32> to vector<8x128xf32>
    %35 = vector.broadcast %33 : vector<8x1xf32> to vector<8x128xf32>
    %36 = arith.mulf %35, %34 : vector<8x128xf32>
    %37 = arith.addf %32, %36 : vector<8x128xf32>
    %38 = vector.extract_strided_slice %2 {offsets = [0, 6], sizes = [8, 1], strides = [1, 1]} : vector<8x32xf32> to vector<8x1xf32>
    %39 = vector.extract_strided_slice %4 {offsets = [0, 768], sizes = [8, 128], strides = [1, 1]} : vector<8x4096xf32> to vector<8x128xf32>
    %40 = vector.broadcast %38 : vector<8x1xf32> to vector<8x128xf32>
    %41 = arith.mulf %40, %39 : vector<8x128xf32>
    %42 = arith.addf %37, %41 : vector<8x128xf32>
    %43 = vector.extract_strided_slice %2 {offsets = [0, 7], sizes = [8, 1], strides = [1, 1]} : vector<8x32xf32> to vector<8x1xf32>
    %44 = vector.extract_strided_slice %4 {offsets = [0, 896], sizes = [8, 128], strides = [1, 1]} : vector<8x4096xf32> to vector<8x128xf32>
    %45 = vector.broadcast %43 : vector<8x1xf32> to vector<8x128xf32>
    %46 = arith.mulf %45, %44 : vector<8x128xf32>
    %47 = arith.addf %42, %46 : vector<8x128xf32>
    %48 = vector.extract_strided_slice %2 {offsets = [0, 8], sizes = [8, 1], strides = [1, 1]} : vector<8x32xf32> to vector<8x1xf32>
    %49 = vector.extract_strided_slice %4 {offsets = [0, 1024], sizes = [8, 128], strides = [1, 1]} : vector<8x4096xf32> to vector<8x128xf32>
    %50 = vector.broadcast %48 : vector<8x1xf32> to vector<8x128xf32>
    %51 = arith.mulf %50, %49 : vector<8x128xf32>
    %52 = arith.addf %47, %51 : vector<8x128xf32>
    %53 = vector.extract_strided_slice %2 {offsets = [0, 9], sizes = [8, 1], strides = [1, 1]} : vector<8x32xf32> to vector<8x1xf32>
    %54 = vector.extract_strided_slice %4 {offsets = [0, 1152], sizes = [8, 128], strides = [1, 1]} : vector<8x4096xf32> to vector<8x128xf32>
    %55 = vector.broadcast %53 : vector<8x1xf32> to vector<8x128xf32>
    %56 = arith.mulf %55, %54 : vector<8x128xf32>
    %57 = arith.addf %52, %56 : vector<8x128xf32>
    %58 = vector.extract_strided_slice %2 {offsets = [0, 10], sizes = [8, 1], strides = [1, 1]} : vector<8x32xf32> to vector<8x1xf32>
    %59 = vector.extract_strided_slice %4 {offsets = [0, 1280], sizes = [8, 128], strides = [1, 1]} : vector<8x4096xf32> to vector<8x128xf32>
    %60 = vector.broadcast %58 : vector<8x1xf32> to vector<8x128xf32>
    %61 = arith.mulf %60, %59 : vector<8x128xf32>
    %62 = arith.addf %57, %61 : vector<8x128xf32>
    %63 = vector.extract_strided_slice %2 {offsets = [0, 11], sizes = [8, 1], strides = [1, 1]} : vector<8x32xf32> to vector<8x1xf32>
    %64 = vector.extract_strided_slice %4 {offsets = [0, 1408], sizes = [8, 128], strides = [1, 1]} : vector<8x4096xf32> to vector<8x128xf32>
    %65 = vector.broadcast %63 : vector<8x1xf32> to vector<8x128xf32>
    %66 = arith.mulf %65, %64 : vector<8x128xf32>
    %67 = arith.addf %62, %66 : vector<8x128xf32>
    %68 = vector.extract_strided_slice %2 {offsets = [0, 12], sizes = [8, 1], strides = [1, 1]} : vector<8x32xf32> to vector<8x1xf32>
    %69 = vector.extract_strided_slice %4 {offsets = [0, 1536], sizes = [8, 128], strides = [1, 1]} : vector<8x4096xf32> to vector<8x128xf32>
    %70 = vector.broadcast %68 : vector<8x1xf32> to vector<8x128xf32>
    %71 = arith.mulf %70, %69 : vector<8x128xf32>
    %72 = arith.addf %67, %71 : vector<8x128xf32>
    %73 = vector.extract_strided_slice %2 {offsets = [0, 13], sizes = [8, 1], strides = [1, 1]} : vector<8x32xf32> to vector<8x1xf32>
    %74 = vector.extract_strided_slice %4 {offsets = [0, 1664], sizes = [8, 128], strides = [1, 1]} : vector<8x4096xf32> to vector<8x128xf32>
    %75 = vector.broadcast %73 : vector<8x1xf32> to vector<8x128xf32>
    %76 = arith.mulf %75, %74 : vector<8x128xf32>
    %77 = arith.addf %72, %76 : vector<8x128xf32>
    %78 = vector.extract_strided_slice %2 {offsets = [0, 14], sizes = [8, 1], strides = [1, 1]} : vector<8x32xf32> to vector<8x1xf32>
    %79 = vector.extract_strided_slice %4 {offsets = [0, 1792], sizes = [8, 128], strides = [1, 1]} : vector<8x4096xf32> to vector<8x128xf32>
    %80 = vector.broadcast %78 : vector<8x1xf32> to vector<8x128xf32>
    %81 = arith.mulf %80, %79 : vector<8x128xf32>
    %82 = arith.addf %77, %81 : vector<8x128xf32>
    %83 = vector.extract_strided_slice %2 {offsets = [0, 15], sizes = [8, 1], strides = [1, 1]} : vector<8x32xf32> to vector<8x1xf32>
    %84 = vector.extract_strided_slice %4 {offsets = [0, 1920], sizes = [8, 128], strides = [1, 1]} : vector<8x4096xf32> to vector<8x128xf32>
    %85 = vector.broadcast %83 : vector<8x1xf32> to vector<8x128xf32>
    %86 = arith.mulf %85, %84 : vector<8x128xf32>
    %87 = arith.addf %82, %86 : vector<8x128xf32>
    %88 = vector.extract_strided_slice %2 {offsets = [0, 16], sizes = [8, 1], strides = [1, 1]} : vector<8x32xf32> to vector<8x1xf32>
    %89 = vector.extract_strided_slice %4 {offsets = [0, 2048], sizes = [8, 128], strides = [1, 1]} : vector<8x4096xf32> to vector<8x128xf32>
    %90 = vector.broadcast %88 : vector<8x1xf32> to vector<8x128xf32>
    %91 = arith.mulf %90, %89 : vector<8x128xf32>
    %92 = arith.addf %87, %91 : vector<8x128xf32>
    %93 = vector.extract_strided_slice %2 {offsets = [0, 17], sizes = [8, 1], strides = [1, 1]} : vector<8x32xf32> to vector<8x1xf32>
    %94 = vector.extract_strided_slice %4 {offsets = [0, 2176], sizes = [8, 128], strides = [1, 1]} : vector<8x4096xf32> to vector<8x128xf32>
    %95 = vector.broadcast %93 : vector<8x1xf32> to vector<8x128xf32>
    %96 = arith.mulf %95, %94 : vector<8x128xf32>
    %97 = arith.addf %92, %96 : vector<8x128xf32>
    %98 = vector.extract_strided_slice %2 {offsets = [0, 18], sizes = [8, 1], strides = [1, 1]} : vector<8x32xf32> to vector<8x1xf32>
    %99 = vector.extract_strided_slice %4 {offsets = [0, 2304], sizes = [8, 128], strides = [1, 1]} : vector<8x4096xf32> to vector<8x128xf32>
    %100 = vector.broadcast %98 : vector<8x1xf32> to vector<8x128xf32>
    %101 = arith.mulf %100, %99 : vector<8x128xf32>
    %102 = arith.addf %97, %101 : vector<8x128xf32>
    %103 = vector.extract_strided_slice %2 {offsets = [0, 19], sizes = [8, 1], strides = [1, 1]} : vector<8x32xf32> to vector<8x1xf32>
    %104 = vector.extract_strided_slice %4 {offsets = [0, 2432], sizes = [8, 128], strides = [1, 1]} : vector<8x4096xf32> to vector<8x128xf32>
    %105 = vector.broadcast %103 : vector<8x1xf32> to vector<8x128xf32>
    %106 = arith.mulf %105, %104 : vector<8x128xf32>
    %107 = arith.addf %102, %106 : vector<8x128xf32>
    %108 = vector.extract_strided_slice %2 {offsets = [0, 20], sizes = [8, 1], strides = [1, 1]} : vector<8x32xf32> to vector<8x1xf32>
    %109 = vector.extract_strided_slice %4 {offsets = [0, 2560], sizes = [8, 128], strides = [1, 1]} : vector<8x4096xf32> to vector<8x128xf32>
    %110 = vector.broadcast %108 : vector<8x1xf32> to vector<8x128xf32>
    %111 = arith.mulf %110, %109 : vector<8x128xf32>
    %112 = arith.addf %107, %111 : vector<8x128xf32>
    %113 = vector.extract_strided_slice %2 {offsets = [0, 21], sizes = [8, 1], strides = [1, 1]} : vector<8x32xf32> to vector<8x1xf32>
    %114 = vector.extract_strided_slice %4 {offsets = [0, 2688], sizes = [8, 128], strides = [1, 1]} : vector<8x4096xf32> to vector<8x128xf32>
    %115 = vector.broadcast %113 : vector<8x1xf32> to vector<8x128xf32>
    %116 = arith.mulf %115, %114 : vector<8x128xf32>
    %117 = arith.addf %112, %116 : vector<8x128xf32>
    %118 = vector.extract_strided_slice %2 {offsets = [0, 22], sizes = [8, 1], strides = [1, 1]} : vector<8x32xf32> to vector<8x1xf32>
    %119 = vector.extract_strided_slice %4 {offsets = [0, 2816], sizes = [8, 128], strides = [1, 1]} : vector<8x4096xf32> to vector<8x128xf32>
    %120 = vector.broadcast %118 : vector<8x1xf32> to vector<8x128xf32>
    %121 = arith.mulf %120, %119 : vector<8x128xf32>
    %122 = arith.addf %117, %121 : vector<8x128xf32>
    %123 = vector.extract_strided_slice %2 {offsets = [0, 23], sizes = [8, 1], strides = [1, 1]} : vector<8x32xf32> to vector<8x1xf32>
    %124 = vector.extract_strided_slice %4 {offsets = [0, 2944], sizes = [8, 128], strides = [1, 1]} : vector<8x4096xf32> to vector<8x128xf32>
    %125 = vector.broadcast %123 : vector<8x1xf32> to vector<8x128xf32>
    %126 = arith.mulf %125, %124 : vector<8x128xf32>
    %127 = arith.addf %122, %126 : vector<8x128xf32>
    %128 = vector.extract_strided_slice %2 {offsets = [0, 24], sizes = [8, 1], strides = [1, 1]} : vector<8x32xf32> to vector<8x1xf32>
    %129 = vector.extract_strided_slice %4 {offsets = [0, 3072], sizes = [8, 128], strides = [1, 1]} : vector<8x4096xf32> to vector<8x128xf32>
    %130 = vector.broadcast %128 : vector<8x1xf32> to vector<8x128xf32>
    %131 = arith.mulf %130, %129 : vector<8x128xf32>
    %132 = arith.addf %127, %131 : vector<8x128xf32>
    %133 = vector.extract_strided_slice %2 {offsets = [0, 25], sizes = [8, 1], strides = [1, 1]} : vector<8x32xf32> to vector<8x1xf32>
    %134 = vector.extract_strided_slice %4 {offsets = [0, 3200], sizes = [8, 128], strides = [1, 1]} : vector<8x4096xf32> to vector<8x128xf32>
    %135 = vector.broadcast %133 : vector<8x1xf32> to vector<8x128xf32>
    %136 = arith.mulf %135, %134 : vector<8x128xf32>
    %137 = arith.addf %132, %136 : vector<8x128xf32>
    %138 = vector.extract_strided_slice %2 {offsets = [0, 26], sizes = [8, 1], strides = [1, 1]} : vector<8x32xf32> to vector<8x1xf32>
    %139 = vector.extract_strided_slice %4 {offsets = [0, 3328], sizes = [8, 128], strides = [1, 1]} : vector<8x4096xf32> to vector<8x128xf32>
    %140 = vector.broadcast %138 : vector<8x1xf32> to vector<8x128xf32>
    %141 = arith.mulf %140, %139 : vector<8x128xf32>
    %142 = arith.addf %137, %141 : vector<8x128xf32>
    %143 = vector.extract_strided_slice %2 {offsets = [0, 27], sizes = [8, 1], strides = [1, 1]} : vector<8x32xf32> to vector<8x1xf32>
    %144 = vector.extract_strided_slice %4 {offsets = [0, 3456], sizes = [8, 128], strides = [1, 1]} : vector<8x4096xf32> to vector<8x128xf32>
    %145 = vector.broadcast %143 : vector<8x1xf32> to vector<8x128xf32>
    %146 = arith.mulf %145, %144 : vector<8x128xf32>
    %147 = arith.addf %142, %146 : vector<8x128xf32>
    %148 = vector.extract_strided_slice %2 {offsets = [0, 28], sizes = [8, 1], strides = [1, 1]} : vector<8x32xf32> to vector<8x1xf32>
    %149 = vector.extract_strided_slice %4 {offsets = [0, 3584], sizes = [8, 128], strides = [1, 1]} : vector<8x4096xf32> to vector<8x128xf32>
    %150 = vector.broadcast %148 : vector<8x1xf32> to vector<8x128xf32>
    %151 = arith.mulf %150, %149 : vector<8x128xf32>
    %152 = arith.addf %147, %151 : vector<8x128xf32>
    %153 = vector.extract_strided_slice %2 {offsets = [0, 29], sizes = [8, 1], strides = [1, 1]} : vector<8x32xf32> to vector<8x1xf32>
    %154 = vector.extract_strided_slice %4 {offsets = [0, 3712], sizes = [8, 128], strides = [1, 1]} : vector<8x4096xf32> to vector<8x128xf32>
    %155 = vector.broadcast %153 : vector<8x1xf32> to vector<8x128xf32>
    %156 = arith.mulf %155, %154 : vector<8x128xf32>
    %157 = arith.addf %152, %156 : vector<8x128xf32>
    %158 = vector.extract_strided_slice %2 {offsets = [0, 30], sizes = [8, 1], strides = [1, 1]} : vector<8x32xf32> to vector<8x1xf32>
    %159 = vector.extract_strided_slice %4 {offsets = [0, 3840], sizes = [8, 128], strides = [1, 1]} : vector<8x4096xf32> to vector<8x128xf32>
    %160 = vector.broadcast %158 : vector<8x1xf32> to vector<8x128xf32>
    %161 = arith.mulf %160, %159 : vector<8x128xf32>
    %162 = arith.addf %157, %161 : vector<8x128xf32>
    %163 = vector.extract_strided_slice %2 {offsets = [0, 31], sizes = [8, 1], strides = [1, 1]} : vector<8x32xf32> to vector<8x1xf32>
    %164 = vector.extract_strided_slice %4 {offsets = [0, 3968], sizes = [8, 128], strides = [1, 1]} : vector<8x4096xf32> to vector<8x128xf32>
    %165 = vector.broadcast %163 : vector<8x1xf32> to vector<8x128xf32>
    %166 = arith.mulf %165, %164 : vector<8x128xf32>
    %167 = arith.addf %162, %166 : vector<8x128xf32>
    %c0_7 = arith.constant 0 : index
    %c0_8 = arith.constant 0 : index
    %168 = vector.load %arg5[%c0_7, %c0_8] : memref<8x128xf32, #tpu.memory_space<vmem>>, vector<8x128xf32>
    tpu.vector_store %arg5[%c0_7, %c0_8], %167 {strides = array<i32>} : memref<8x128xf32, #tpu.memory_space<vmem>>, vector<8x128xf32>,
    return
  }
  func.func @transform_0(%arg0: i32) -> (i32, i32) {
    %c0_i32 = arith.constant 0 : i32
    %c0_i32_0 = arith.constant 0 : i32
    return %arg0, %c0_i32 : i32, i32
  }
  func.func @transform_1(%arg0: i32) -> (i32, i32) {
    %c0_i32 = arith.constant 0 : i32
    %c0_i32_0 = arith.constant 0 : i32
    return %arg0, %c0_i32 : i32, i32
  }
  func.func @transform_2(%arg0: i32) -> (i32, i32) {
    %c0_i32 = arith.constant 0 : i32
    %c0_i32_0 = arith.constant 0 : i32
    %c0_i32_1 = arith.constant 0 : i32
    return %c0_i32, %c0_i32_0 : i32, i32
  }
  func.func @transform_3(%arg0: i32) -> (i32, i32) {
    %c0_i32 = arith.constant 0 : i32
    %c0_i32_0 = arith.constant 0 : i32
    %c0_i32_1 = arith.constant 0 : i32
    return %c0_i32, %c0_i32_0 : i32, i32
  }
  func.func @transform_4(%arg0: i32) -> (i32, i32) {
    %c0_i32 = arith.constant 0 : i32
    %c0_i32_0 = arith.constant 0 : i32
    return %arg0, %c0_i32 : i32, i32
  }
}

</mosaic_0001>

<llo_original>
// kernel: tpu_custom_call.1
$region0: #{tpu_custom_call.1}
  #allocation0 [shape = 'u32[]', space=smem, size = 0x4, offset = 0x4, fixed_abs, tag = 'smem constant byte address 0x4 - core index']
  #allocation1 [shape = 'u32[144,128]{1,0:T(1,128)}', space=vmem, size = 0x12000, scoped, tag = 'internal scratch']
  %s0 = inlined_call_operand.hbm [shape: f32[8,32], index: 0, kind: input, shape index: {}]
  %s1 = inlined_call_operand.hbm [shape: f32[8,32], index: 1, kind: input, shape index: {}]
  %s2 = inlined_call_operand.hbm [shape: bf16[32,4096], index: 2, kind: input, shape index: {}]
  %s3 = inlined_call_operand.vmem [shape: f32[1,128], index: 3, kind: input, shape index: {}]
  %s4 = inlined_call_operand.hbm [shape: f32[8,128], index: 4, kind: output, shape index: {}]
  %s5 = sld [smem:[#allocation0]]
  $region38: #{tpu_custom_call.1} parent=0
    _
  %s7 = ssub.s32 1, %s5
  %s8 = scalar_select 0, %s7, %s5
  $region1: #{tpu_custom_call.1} parent=0
    #allocation2 [shape = 'u8[4096]{0}', space=vmem, size = 0x1000, scoped, tag = 'input window, operand 0, single buffered']
    #allocation3 [shape = 's32[1]{0}', space=sflag, size = 0x4, scoped, tag = 'scoped memory for tpu_custom_call.1']
    #allocation4 [shape = 's32[1]{0}', space=sflag, size = 0x4, scoped, tag = 'scoped memory for tpu_custom_call.1']
    #allocation5 [shape = 'u8[4096]{0}', space=vmem, size = 0x1000, scoped, tag = 'input window, operand 1, single buffered']
    #allocation6 [shape = 's32[1]{0}', space=sflag, size = 0x4, scoped, tag = 'scoped memory for tpu_custom_call.1']
    #allocation7 [shape = 'u8[262144]{0}', space=vmem, size = 0x40000, scoped, tag = 'input window, operand 2, single buffered']
    #allocation8 [shape = 'u8[4096]{0}', space=vmem, size = 0x1000, scoped, tag = 'output window, operand 0, single buffered']
    %9 = vsyncpa [#allocation3], 0
    %10 = vsyncpa [#allocation6], 0
    %11 = vsyncpa [#allocation4], 0
    // Predicated region
    $region2: #{tpu_custom_call.1} parent=1 // pred_check
      _
    $region3: #{tpu_custom_call.1} parent=1 // pred_check_branch
      %13 = sbr.rel (0) target = $region5
    $region4: #{tpu_custom_call.1} parent=1 // pred_region
      %s15 = ssub.s32 128, 128
      %16 = vsyncadd [#allocation3], %s15
      %s18 = sshll.u32 [#allocation2], 4
      %s19 = int_to_ptr.vmem [resolvable:$true] %s18
      %21 = dma.hbm_to_vmem [thread:$0]  %s0, 128, %s19, [#allocation3]
    $region5: #{tpu_custom_call.1} parent=1 // pred_fallthru
      _
    // Predicated region
    $region6: #{tpu_custom_call.1} parent=1 // pred_check
      _
    $region7: #{tpu_custom_call.1} parent=1 // pred_check_branch
      %23 = sbr.rel (0) target = $region9
    $region8: #{tpu_custom_call.1} parent=1 // pred_region
      %s25 = ssub.s32 128, 128
      %26 = vsyncadd [#allocation6], %s25
      %s28 = sshll.u32 [#allocation5], 4
      %s29 = int_to_ptr.vmem [resolvable:$true] %s28
      %31 = dma.hbm_to_vmem [thread:$0]  %s1, 128, %s29, [#allocation6]
    $region9: #{tpu_custom_call.1} parent=1 // pred_fallthru
      _
    // Predicated region
    $region10: #{tpu_custom_call.1} parent=1 // pred_check
      _
    $region11: #{tpu_custom_call.1} parent=1 // pred_check_branch
      %33 = sbr.rel (0) target = $region13
    $region12: #{tpu_custom_call.1} parent=1 // pred_region
      %s35 = ssub.s32 8192, 8192
      %36 = vsyncadd [#allocation6], %s35
      %s37 = sshll.u32 [#allocation7], 4
      %s38 = int_to_ptr.vmem [resolvable:$true] %s37
      %43 = dma.hbm_to_vmem [thread:$0]  %s2, 8192, %s38, [#allocation6], 2048, 2048, 128
    $region13: #{tpu_custom_call.1} parent=1 // pred_fallthru
      _
    // Predicated region
    $region14: #{tpu_custom_call.1} parent=1 // pred_check
      _
    $region15: #{tpu_custom_call.1} parent=1 // pred_check_branch
      %45 = sbr.rel (0) target = $region17
    $region16: #{tpu_custom_call.1} parent=1 // pred_region
      _
    $region17: #{tpu_custom_call.1} parent=1 // pred_fallthru
      _
    // Predicated region
    $region18: #{tpu_custom_call.1} parent=1 // pred_check
      _
    $region19: #{tpu_custom_call.1} parent=1 // pred_check_branch
      %47 = sbr.rel (0) target = $region21
    $region20: #{tpu_custom_call.1} parent=1 // pred_region
      %48 = dma.done [#allocation3], 128
    $region21: #{tpu_custom_call.1} parent=1 // pred_fallthru
      _
    // Predicated region
    $region22: #{tpu_custom_call.1} parent=1 // pred_check
      _
    $region23: #{tpu_custom_call.1} parent=1 // pred_check_branch
      %50 = sbr.rel (0) target = $region25
    $region24: #{tpu_custom_call.1} parent=1 // pred_region
      %51 = dma.done [#allocation6], 128
    $region25: #{tpu_custom_call.1} parent=1 // pred_fallthru
      _
    // Predicated region
    $region26: #{tpu_custom_call.1} parent=1 // pred_check
      _
    $region27: #{tpu_custom_call.1} parent=1 // pred_check_branch
      %53 = sbr.rel (0) target = $region29
    $region28: #{tpu_custom_call.1} parent=1 // pred_region
      %54 = dma.done [#allocation6], 8192
    $region29: #{tpu_custom_call.1} parent=1 // pred_fallthru
      _
    %v56 = vld [vmem:[#allocation2] sm:$0xff]
    %v57 = vpack.c.bf16 %v56, %v56
    %v58 = vld [vmem:[#allocation5] sm:$0xff]
    %v59 = vld [vmem:[#allocation7] sm:$0xff]
    %v60 = vld [vmem:[#allocation7 + $0x8] sm:$0xff]
    %v61 = vld [vmem:[#allocation7 + $0x10] sm:$0xff]
    %v62 = vld [vmem:[#allocation7 + $0x18] sm:$0xff]
    %v63 = vld [vmem:[#allocation7 + $0x20] sm:$0xff]
    %v64 = vld [vmem:[#allocation7 + $0x28] sm:$0xff]
    %v65 = vld [vmem:[#allocation7 + $0x30] sm:$0xff]
    %v66 = vld [vmem:[#allocation7 + $0x38] sm:$0xff]
    %v67 = vld [vmem:[#allocation7 + $0x40] sm:$0xff]
    %v68 = vld [vmem:[#allocation7 + $0x48] sm:$0xff]
    %v69 = vld [vmem:[#allocation7 + $0x50] sm:$0xff]
    %v70 = vld [vmem:[#allocation7 + $0x58] sm:$0xff]
    %v71 = vld [vmem:[#allocation7 + $0x60] sm:$0xff]
    %v72 = vld [vmem:[#allocation7 + $0x68] sm:$0xff]
    %v73 = vld [vmem:[#allocation7 + $0x70] sm:$0xff]
    %v74 = vld [vmem:[#allocation7 + $0x78] sm:$0xff]
    %v75 = vld [vmem:[#allocation7 + $0x80] sm:$0xff]
    %v76 = vld [vmem:[#allocation7 + $0x88] sm:$0xff]
    %v77 = vld [vmem:[#allocation7 + $0x90] sm:$0xff]
    %v78 = vld [vmem:[#allocation7 + $0x98] sm:$0xff]
    %v79 = vld [vmem:[#allocation7 + $0xa0] sm:$0xff]
    %v80 = vld [vmem:[#allocation7 + $0xa8] sm:$0xff]
    %v81 = vld [vmem:[#allocation7 + $0xb0] sm:$0xff]
    %v82 = vld [vmem:[#allocation7 + $0xb8] sm:$0xff]
    %v83 = vld [vmem:[#allocation7 + $0xc0] sm:$0xff]
    %v84 = vld [vmem:[#allocation7 + $0xc8] sm:$0xff]
    %v85 = vld [vmem:[#allocation7 + $0xd0] sm:$0xff]
    %v86 = vld [vmem:[#allocation7 + $0xd8] sm:$0xff]
    %v87 = vld [vmem:[#allocation7 + $0xe0] sm:$0xff]
    %v88 = vld [vmem:[#allocation7 + $0xe8] sm:$0xff]
    %v89 = vld [vmem:[#allocation7 + $0xf0] sm:$0xff]
    %v90 = vld [vmem:[#allocation7 + $0xf8] sm:$0xff]
    %v91 = vld [vmem:[#allocation7 + $0x100] sm:$0xff]
    %v92 = vld [vmem:[#allocation7 + $0x108] sm:$0xff]
    %v93 = vld [vmem:[#allocation7 + $0x110] sm:$0xff]
    %v94 = vld [vmem:[#allocation7 + $0x118] sm:$0xff]
    %v95 = vld [vmem:[#allocation7 + $0x120] sm:$0xff]
    %v96 = vld [vmem:[#allocation7 + $0x128] sm:$0xff]
    %v97 = vld [vmem:[#allocation7 + $0x130] sm:$0xff]
    %v98 = vld [vmem:[#allocation7 + $0x138] sm:$0xff]
    %v99 = vld [vmem:[#allocation7 + $0x140] sm:$0xff]
    %v100 = vld [vmem:[#allocation7 + $0x148] sm:$0xff]
    %v101 = vld [vmem:[#allocation7 + $0x150] sm:$0xff]
    %v102 = vld [vmem:[#allocation7 + $0x158] sm:$0xff]
    %v103 = vld [vmem:[#allocation7 + $0x160] sm:$0xff]
    %v104 = vld [vmem:[#allocation7 + $0x168] sm:$0xff]
    %v105 = vld [vmem:[#allocation7 + $0x170] sm:$0xff]
    %v106 = vld [vmem:[#allocation7 + $0x178] sm:$0xff]
    %v107 = vld [vmem:[#allocation7 + $0x180] sm:$0xff]
    %v108 = vld [vmem:[#allocation7 + $0x188] sm:$0xff]
    %v109 = vld [vmem:[#allocation7 + $0x190] sm:$0xff]
    %v110 = vld [vmem:[#allocation7 + $0x198] sm:$0xff]
    %v111 = vld [vmem:[#allocation7 + $0x1a0] sm:$0xff]
    %v112 = vld [vmem:[#allocation7 + $0x1a8] sm:$0xff]
    %v113 = vld [vmem:[#allocation7 + $0x1b0] sm:$0xff]
    %v114 = vld [vmem:[#allocation7 + $0x1b8] sm:$0xff]
    %v115 = vld [vmem:[#allocation7 + $0x1c0] sm:$0xff]
    %v116 = vld [vmem:[#allocation7 + $0x1c8] sm:$0xff]
    %v117 = vld [vmem:[#allocation7 + $0x1d0] sm:$0xff]
    %v118 = vld [vmem:[#allocation7 + $0x1d8] sm:$0xff]
    %v119 = vld [vmem:[#allocation7 + $0x1e0] sm:$0xff]
    %v120 = vld [vmem:[#allocation7 + $0x1e8] sm:$0xff]
    %v121 = vld [vmem:[#allocation7 + $0x1f0] sm:$0xff]
    %v122 = vld [vmem:[#allocation7 + $0x1f8] sm:$0xff]
    %v187 = vunpack.c.l.b16 %v59
    %v188 = vunpack.c.h.b16 %v59
    %v189 = vunpack.c.l.b16 %v60
    %v190 = vunpack.c.h.b16 %v60
    %v191 = vunpack.c.l.b16 %v61
    %v192 = vunpack.c.h.b16 %v61
    %v193 = vunpack.c.l.b16 %v62
    %v194 = vunpack.c.h.b16 %v62
    %v195 = vunpack.c.l.b16 %v63
    %v196 = vunpack.c.h.b16 %v63
    %v197 = vunpack.c.l.b16 %v64
    %v198 = vunpack.c.h.b16 %v64
    %v199 = vunpack.c.l.b16 %v65
    %v200 = vunpack.c.h.b16 %v65
    %v201 = vunpack.c.l.b16 %v66
    %v202 = vunpack.c.h.b16 %v66
    %v203 = vunpack.c.l.b16 %v67
    %v204 = vunpack.c.h.b16 %v67
    %v205 = vunpack.c.l.b16 %v68
    %v206 = vunpack.c.h.b16 %v68
    %v207 = vunpack.c.l.b16 %v69
    %v208 = vunpack.c.h.b16 %v69
    %v209 = vunpack.c.l.b16 %v70
    %v210 = vunpack.c.h.b16 %v70
    %v211 = vunpack.c.l.b16 %v71
    %v212 = vunpack.c.h.b16 %v71
    %v213 = vunpack.c.l.b16 %v72
    %v214 = vunpack.c.h.b16 %v72
    %v215 = vunpack.c.l.b16 %v73
    %v216 = vunpack.c.h.b16 %v73
    %v217 = vunpack.c.l.b16 %v74
    %v218 = vunpack.c.h.b16 %v74
    %v219 = vunpack.c.l.b16 %v75
    %v220 = vunpack.c.h.b16 %v75
    %v221 = vunpack.c.l.b16 %v76
    %v222 = vunpack.c.h.b16 %v76
    %v223 = vunpack.c.l.b16 %v77
    %v224 = vunpack.c.h.b16 %v77
    %v225 = vunpack.c.l.b16 %v78
    %v226 = vunpack.c.h.b16 %v78
    %v227 = vunpack.c.l.b16 %v79
    %v228 = vunpack.c.h.b16 %v79
    %v229 = vunpack.c.l.b16 %v80
    %v230 = vunpack.c.h.b16 %v80
    %v231 = vunpack.c.l.b16 %v81
    %v232 = vunpack.c.h.b16 %v81
    %v233 = vunpack.c.l.b16 %v82
    %v234 = vunpack.c.h.b16 %v82
    %v235 = vunpack.c.l.b16 %v83
    %v236 = vunpack.c.h.b16 %v83
    %v237 = vunpack.c.l.b16 %v84
    %v238 = vunpack.c.h.b16 %v84
    %v239 = vunpack.c.l.b16 %v85
    %v240 = vunpack.c.h.b16 %v85
    %v241 = vunpack.c.l.b16 %v86
    %v242 = vunpack.c.h.b16 %v86
    %v243 = vunpack.c.l.b16 %v87
    %v244 = vunpack.c.h.b16 %v87
    %v245 = vunpack.c.l.b16 %v88
    %v246 = vunpack.c.h.b16 %v88
    %v247 = vunpack.c.l.b16 %v89
    %v248 = vunpack.c.h.b16 %v89
    %v249 = vunpack.c.l.b16 %v90
    %v250 = vunpack.c.h.b16 %v90
    %v251 = vunpack.c.l.b16 %v91
    %v252 = vunpack.c.h.b16 %v91
    %v253 = vunpack.c.l.b16 %v92
    %v254 = vunpack.c.h.b16 %v92
    %v255 = vunpack.c.l.b16 %v93
    %v256 = vunpack.c.h.b16 %v93
    %v257 = vunpack.c.l.b16 %v94
    %v258 = vunpack.c.h.b16 %v94
    %v259 = vunpack.c.l.b16 %v95
    %v260 = vunpack.c.h.b16 %v95
    %v261 = vunpack.c.l.b16 %v96
    %v262 = vunpack.c.h.b16 %v96
    %v263 = vunpack.c.l.b16 %v97
    %v264 = vunpack.c.h.b16 %v97
    %v265 = vunpack.c.l.b16 %v98
    %v266 = vunpack.c.h.b16 %v98
    %v267 = vunpack.c.l.b16 %v99
    %v268 = vunpack.c.h.b16 %v99
    %v269 = vunpack.c.l.b16 %v100
    %v270 = vunpack.c.h.b16 %v100
    %v271 = vunpack.c.l.b16 %v101
    %v272 = vunpack.c.h.b16 %v101
    %v273 = vunpack.c.l.b16 %v102
    %v274 = vunpack.c.h.b16 %v102
    %v275 = vunpack.c.l.b16 %v103
    %v276 = vunpack.c.h.b16 %v103
    %v277 = vunpack.c.l.b16 %v104
    %v278 = vunpack.c.h.b16 %v104
    %v279 = vunpack.c.l.b16 %v105
    %v280 = vunpack.c.h.b16 %v105
    %v281 = vunpack.c.l.b16 %v106
    %v282 = vunpack.c.h.b16 %v106
    %v283 = vunpack.c.l.b16 %v107
    %v284 = vunpack.c.h.b16 %v107
    %v285 = vunpack.c.l.b16 %v108
    %v286 = vunpack.c.h.b16 %v108
    %v287 = vunpack.c.l.b16 %v109
    %v288 = vunpack.c.h.b16 %v109
    %v289 = vunpack.c.l.b16 %v110
    %v290 = vunpack.c.h.b16 %v110
    %v291 = vunpack.c.l.b16 %v111
    %v292 = vunpack.c.h.b16 %v111
    %v293 = vunpack.c.l.b16 %v112
    %v294 = vunpack.c.h.b16 %v112
    %v295 = vunpack.c.l.b16 %v113
    %v296 = vunpack.c.h.b16 %v113
    %v297 = vunpack.c.l.b16 %v114
    %v298 = vunpack.c.h.b16 %v114
    %v299 = vunpack.c.l.b16 %v115
    %v300 = vunpack.c.h.b16 %v115
    %v301 = vunpack.c.l.b16 %v116
    %v302 = vunpack.c.h.b16 %v116
    %v303 = vunpack.c.l.b16 %v117
    %v304 = vunpack.c.h.b16 %v117
    %v305 = vunpack.c.l.b16 %v118
    %v306 = vunpack.c.h.b16 %v118
    %v307 = vunpack.c.l.b16 %v119
    %v308 = vunpack.c.h.b16 %v119
    %v309 = vunpack.c.l.b16 %v120
    %v310 = vunpack.c.h.b16 %v120
    %v311 = vunpack.c.l.b16 %v121
    %v312 = vunpack.c.h.b16 %v121
    %v313 = vunpack.c.l.b16 %v122
    %v314 = vunpack.c.h.b16 %v122
    %v315 = vpack.c.b16 %v219, %v187
    %v316 = vpack.c.b16 %v220, %v188
    %v317 = vpack.c.b16 %v221, %v189
    %v318 = vpack.c.b16 %v222, %v190
    %v319 = vpack.c.b16 %v223, %v191
    %v320 = vpack.c.b16 %v224, %v192
    %v321 = vpack.c.b16 %v225, %v193
    %v322 = vpack.c.b16 %v226, %v194
    %v323 = vpack.c.b16 %v227, %v195
    %v324 = vpack.c.b16 %v228, %v196
    %v325 = vpack.c.b16 %v229, %v197
    %v326 = vpack.c.b16 %v230, %v198
    %v327 = vpack.c.b16 %v231, %v199
    %v328 = vpack.c.b16 %v232, %v200
    %v329 = vpack.c.b16 %v233, %v201
    %v330 = vpack.c.b16 %v234, %v202
    %v331 = vpack.c.b16 %v235, %v203
    %v332 = vpack.c.b16 %v236, %v204
    %v333 = vpack.c.b16 %v237, %v205
    %v334 = vpack.c.b16 %v238, %v206
    %v335 = vpack.c.b16 %v239, %v207
    %v336 = vpack.c.b16 %v240, %v208
    %v337 = vpack.c.b16 %v241, %v209
    %v338 = vpack.c.b16 %v242, %v210
    %v339 = vpack.c.b16 %v243, %v211
    %v340 = vpack.c.b16 %v244, %v212
    %v341 = vpack.c.b16 %v245, %v213
    %v342 = vpack.c.b16 %v246, %v214
    %v343 = vpack.c.b16 %v247, %v215
    %v344 = vpack.c.b16 %v248, %v216
    %v345 = vpack.c.b16 %v249, %v217
    %v346 = vpack.c.b16 %v250, %v218
    %v347 = vpack.c.b16 %v283, %v251
    %v348 = vpack.c.b16 %v284, %v252
    %v349 = vpack.c.b16 %v285, %v253
    %v350 = vpack.c.b16 %v286, %v254
    %v351 = vpack.c.b16 %v287, %v255
    %v352 = vpack.c.b16 %v288, %v256
    %v353 = vpack.c.b16 %v289, %v257
    %v354 = vpack.c.b16 %v290, %v258
    %v355 = vpack.c.b16 %v291, %v259
    %v356 = vpack.c.b16 %v292, %v260
    %v357 = vpack.c.b16 %v293, %v261
    %v358 = vpack.c.b16 %v294, %v262
    %v359 = vpack.c.b16 %v295, %v263
    %v360 = vpack.c.b16 %v296, %v264
    %v361 = vpack.c.b16 %v297, %v265
    %v362 = vpack.c.b16 %v298, %v266
    %v363 = vpack.c.b16 %v299, %v267
    %v364 = vpack.c.b16 %v300, %v268
    %v365 = vpack.c.b16 %v301, %v269
    %v366 = vpack.c.b16 %v302, %v270
    %v367 = vpack.c.b16 %v303, %v271
    %v368 = vpack.c.b16 %v304, %v272
    %v369 = vpack.c.b16 %v305, %v273
    %v370 = vpack.c.b16 %v306, %v274
    %v371 = vpack.c.b16 %v307, %v275
    %v372 = vpack.c.b16 %v308, %v276
    %v373 = vpack.c.b16 %v309, %v277
    %v374 = vpack.c.b16 %v310, %v278
    %v375 = vpack.c.b16 %v311, %v279
    %v376 = vpack.c.b16 %v312, %v280
    %v377 = vpack.c.b16 %v313, %v281
    %v378 = vpack.c.b16 %v314, %v282
    %vm443 = vcmask 261120
    %v445 = vsel %vm443, %v57, 0
    %447 = vmatprep.subr.bf16.mxu0 %v316
    %448 = vmatpush1.bf16.msra.mxu0 %v315
    %449 = vmatprep.subr.bf16.mxu0 %v348
    %450 = vmatpush1.bf16.msra.mxu0 %v347
    %451 = vmatprep.subr.bf16.mxu0 0
    %452 = vmatpush1.bf16.msra.mxu0 0
    %453 = vmatprep.subr.bf16.mxu0 0
    %454 = vmatpush1.bf16.msra.mxu0 0
    %455 = vmatprep.subr.bf16.mxu0 0
    %456 = vmatpush1.bf16.msra.mxu0 0
    %457 = vmatprep.subr.bf16.mxu0 0
    %458 = vmatpush1.bf16.msra.mxu0 0
    %459 = vmatprep.subr.bf16.mxu0 0
    %460 = vmatpush1.bf16.msra.mxu0 0
    %461 = vmatprep.subr.bf16.mxu0 0
    %462 = vmatpush1.bf16.msra.mxu0 0
    %463 = vmatprep.subr.bf16.mxu0 0
    %464 = vmatpush1.bf16.msra.mxu0 0
    %465 = vmatprep.subr.bf16.mxu0 0
    %466 = vmatpush1.bf16.msra.mxu0 0
    %467 = vmatprep.subr.bf16.mxu0 0
    %468 = vmatpush1.bf16.msra.mxu0 0
    %469 = vmatprep.subr.bf16.mxu0 0
    %470 = vmatpush1.bf16.msra.mxu0 0
    %471 = vmatprep.subr.bf16.mxu0 0
    %472 = vmatpush1.bf16.msra.mxu0 0
    %473 = vmatprep.subr.bf16.mxu0 0
    %474 = vmatpush1.bf16.msra.mxu0 0
    %475 = vmatprep.subr.bf16.mxu0 0
    %476 = vmatpush1.bf16.msra.mxu0 0
    %477 = vmatprep.subr.bf16.mxu0 0
    %478 = vmatpush1.bf16.msra.mxu0 0
    %479 = vmatprep.mubr.bf16.mxu0 0
    %480 = vmatmul.mubr.bf16.gmra.mrb[0].mxu0 %v445
    %v481 = vpop.f32.mrb[0].mxu0
    %v482 = vadd.f32 0.0, %v481
    %v483 = vpop.f32.mrb[0].mxu0
    %v484 = vadd.f32 0.0, %v483
    %v485 = vpop.f32.mrb[0].mxu0
    %v486 = vpop.f32.mrb[0].mxu0
    %487 = vdwg.mxu0
    %488 = vmatprep.subr.bf16.mxu0 %v318
    %489 = vmatpush1.bf16.msra.mxu0 %v317
    %490 = vmatprep.subr.bf16.mxu0 %v350
    %491 = vmatpush1.bf16.msra.mxu0 %v349
    %492 = vmatprep.subr.bf16.mxu0 0
    %493 = vmatpush1.bf16.msra.mxu0 0
    %494 = vmatprep.subr.bf16.mxu0 0
    %495 = vmatpush1.bf16.msra.mxu0 0
    %496 = vmatprep.subr.bf16.mxu0 0
    %497 = vmatpush1.bf16.msra.mxu0 0
    %498 = vmatprep.subr.bf16.mxu0 0
    %499 = vmatpush1.bf16.msra.mxu0 0
    %500 = vmatprep.subr.bf16.mxu0 0
    %501 = vmatpush1.bf16.msra.mxu0 0
    %502 = vmatprep.subr.bf16.mxu0 0
    %503 = vmatpush1.bf16.msra.mxu0 0
    %504 = vmatprep.subr.bf16.mxu0 0
    %505 = vmatpush1.bf16.msra.mxu0 0
    %506 = vmatprep.subr.bf16.mxu0 0
    %507 = vmatpush1.bf16.msra.mxu0 0
    %508 = vmatprep.subr.bf16.mxu0 0
    %509 = vmatpush1.bf16.msra.mxu0 0
    %510 = vmatprep.subr.bf16.mxu0 0
    %511 = vmatpush1.bf16.msra.mxu0 0
    %512 = vmatprep.subr.bf16.mxu0 0
    %513 = vmatpush1.bf16.msra.mxu0 0
    %514 = vmatprep.subr.bf16.mxu0 0
    %515 = vmatpush1.bf16.msra.mxu0 0
    %516 = vmatprep.subr.bf16.mxu0 0
    %517 = vmatpush1.bf16.msra.mxu0 0
    %518 = vmatprep.subr.bf16.mxu0 0
    %519 = vmatpush1.bf16.msra.mxu0 0
    %520 = vmatprep.mubr.bf16.mxu0 0
    %521 = vmatmul.mubr.bf16.gmra.mrb[0].mxu0 %v445
    %v522 = vpop.f32.mrb[0].mxu0
    %v523 = vadd.f32 0.0, %v522
    %v524 = vpop.f32.mrb[0].mxu0
    %v525 = vadd.f32 0.0, %v524
    %v526 = vpop.f32.mrb[0].mxu0
    %v527 = vpop.f32.mrb[0].mxu0
    %528 = vdwg.mxu0
    %529 = vmatprep.subr.bf16.mxu0 %v320
    %530 = vmatpush1.bf16.msra.mxu0 %v319
    %531 = vmatprep.subr.bf16.mxu0 %v352
    %532 = vmatpush1.bf16.msra.mxu0 %v351
    %533 = vmatprep.subr.bf16.mxu0 0
    %534 = vmatpush1.bf16.msra.mxu0 0
    %535 = vmatprep.subr.bf16.mxu0 0
    %536 = vmatpush1.bf16.msra.mxu0 0
    %537 = vmatprep.subr.bf16.mxu0 0
    %538 = vmatpush1.bf16.msra.mxu0 0
    %539 = vmatprep.subr.bf16.mxu0 0
    %540 = vmatpush1.bf16.msra.mxu0 0
    %541 = vmatprep.subr.bf16.mxu0 0
    %542 = vmatpush1.bf16.msra.mxu0 0
    %543 = vmatprep.subr.bf16.mxu0 0
    %544 = vmatpush1.bf16.msra.mxu0 0
    %545 = vmatprep.subr.bf16.mxu0 0
    %546 = vmatpush1.bf16.msra.mxu0 0
    %547 = vmatprep.subr.bf16.mxu0 0
    %548 = vmatpush1.bf16.msra.mxu0 0
    %549 = vmatprep.subr.bf16.mxu0 0
    %550 = vmatpush1.bf16.msra.mxu0 0
    %551 = vmatprep.subr.bf16.mxu0 0
    %552 = vmatpush1.bf16.msra.mxu0 0
    %553 = vmatprep.subr.bf16.mxu0 0
    %554 = vmatpush1.bf16.msra.mxu0 0
    %555 = vmatprep.subr.bf16.mxu0 0
    %556 = vmatpush1.bf16.msra.mxu0 0
    %557 = vmatprep.subr.bf16.mxu0 0
    %558 = vmatpush1.bf16.msra.mxu0 0
    %559 = vmatprep.subr.bf16.mxu0 0
    %560 = vmatpush1.bf16.msra.mxu0 0
    %561 = vmatprep.mubr.bf16.mxu0 0
    %562 = vmatmul.mubr.bf16.gmra.mrb[0].mxu0 %v445
    %v563 = vpop.f32.mrb[0].mxu0
    %v564 = vadd.f32 0.0, %v563
    %v565 = vpop.f32.mrb[0].mxu0
    %v566 = vadd.f32 0.0, %v565
    %v567 = vpop.f32.mrb[0].mxu0
    %v568 = vpop.f32.mrb[0].mxu0
    %569 = vdwg.mxu0
    %570 = vmatprep.subr.bf16.mxu0 %v322
    %571 = vmatpush1.bf16.msra.mxu0 %v321
    %572 = vmatprep.subr.bf16.mxu0 %v354
    %573 = vmatpush1.bf16.msra.mxu0 %v353
    %574 = vmatprep.subr.bf16.mxu0 0
    %575 = vmatpush1.bf16.msra.mxu0 0
    %576 = vmatprep.subr.bf16.mxu0 0
    %577 = vmatpush1.bf16.msra.mxu0 0
    %578 = vmatprep.subr.bf16.mxu0 0
    %579 = vmatpush1.bf16.msra.mxu0 0
    %580 = vmatprep.subr.bf16.mxu0 0
    %581 = vmatpush1.bf16.msra.mxu0 0
    %582 = vmatprep.subr.bf16.mxu0 0
    %583 = vmatpush1.bf16.msra.mxu0 0
    %584 = vmatprep.subr.bf16.mxu0 0
    %585 = vmatpush1.bf16.msra.mxu0 0
    %586 = vmatprep.subr.bf16.mxu0 0
    %587 = vmatpush1.bf16.msra.mxu0 0
    %588 = vmatprep.subr.bf16.mxu0 0
    %589 = vmatpush1.bf16.msra.mxu0 0
    %590 = vmatprep.subr.bf16.mxu0 0
    %591 = vmatpush1.bf16.msra.mxu0 0
    %592 = vmatprep.subr.bf16.mxu0 0
    %593 = vmatpush1.bf16.msra.mxu0 0
    %594 = vmatprep.subr.bf16.mxu0 0
    %595 = vmatpush1.bf16.msra.mxu0 0
    %596 = vmatprep.subr.bf16.mxu0 0
    %597 = vmatpush1.bf16.msra.mxu0 0
    %598 = vmatprep.subr.bf16.mxu0 0
    %599 = vmatpush1.bf16.msra.mxu0 0
    %600 = vmatprep.subr.bf16.mxu0 0
    %601 = vmatpush1.bf16.msra.mxu0 0
    %602 = vmatprep.mubr.bf16.mxu0 0
    %603 = vmatmul.mubr.bf16.gmra.mrb[0].mxu0 %v445
    %v604 = vpop.f32.mrb[0].mxu0
    %v605 = vadd.f32 0.0, %v604
    %v606 = vpop.f32.mrb[0].mxu0
    %v607 = vadd.f32 0.0, %v606
    %v608 = vpop.f32.mrb[0].mxu0
    %v609 = vpop.f32.mrb[0].mxu0
    %610 = vdwg.mxu0
    %611 = vmatprep.subr.bf16.mxu0 %v324
    %612 = vmatpush1.bf16.msra.mxu0 %v323
    %613 = vmatprep.subr.bf16.mxu0 %v356
    %614 = vmatpush1.bf16.msra.mxu0 %v355
    %615 = vmatprep.subr.bf16.mxu0 0
    %616 = vmatpush1.bf16.msra.mxu0 0
    %617 = vmatprep.subr.bf16.mxu0 0
    %618 = vmatpush1.bf16.msra.mxu0 0
    %619 = vmatprep.subr.bf16.mxu0 0
    %620 = vmatpush1.bf16.msra.mxu0 0
    %621 = vmatprep.subr.bf16.mxu0 0
    %622 = vmatpush1.bf16.msra.mxu0 0
    %623 = vmatprep.subr.bf16.mxu0 0
    %624 = vmatpush1.bf16.msra.mxu0 0
    %625 = vmatprep.subr.bf16.mxu0 0
    %626 = vmatpush1.bf16.msra.mxu0 0
    %627 = vmatprep.subr.bf16.mxu0 0
    %628 = vmatpush1.bf16.msra.mxu0 0
    %629 = vmatprep.subr.bf16.mxu0 0
    %630 = vmatpush1.bf16.msra.mxu0 0
    %631 = vmatprep.subr.bf16.mxu0 0
    %632 = vmatpush1.bf16.msra.mxu0 0
    %633 = vmatprep.subr.bf16.mxu0 0
    %634 = vmatpush1.bf16.msra.mxu0 0
    %635 = vmatprep.subr.bf16.mxu0 0
    %636 = vmatpush1.bf16.msra.mxu0 0
    %637 = vmatprep.subr.bf16.mxu0 0
    %638 = vmatpush1.bf16.msra.mxu0 0
    %639 = vmatprep.subr.bf16.mxu0 0
    %640 = vmatpush1.bf16.msra.mxu0 0
    %641 = vmatprep.subr.bf16.mxu0 0
    %642 = vmatpush1.bf16.msra.mxu0 0
    %643 = vmatprep.mubr.bf16.mxu0 0
    %644 = vmatmul.mubr.bf16.gmra.mrb[0].mxu0 %v445
    %v645 = vpop.f32.mrb[0].mxu0
    %v646 = vadd.f32 0.0, %v645
    %v647 = vpop.f32.mrb[0].mxu0
    %v648 = vadd.f32 0.0, %v647
    %v649 = vpop.f32.mrb[0].mxu0
    %v650 = vpop.f32.mrb[0].mxu0
    %651 = vdwg.mxu0
    %652 = vmatprep.subr.bf16.mxu0 %v326
    %653 = vmatpush1.bf16.msra.mxu0 %v325
    %654 = vmatprep.subr.bf16.mxu0 %v358
    %655 = vmatpush1.bf16.msra.mxu0 %v357
    %656 = vmatprep.subr.bf16.mxu0 0
    %657 = vmatpush1.bf16.msra.mxu0 0
    %658 = vmatprep.subr.bf16.mxu0 0
    %659 = vmatpush1.bf16.msra.mxu0 0
    %660 = vmatprep.subr.bf16.mxu0 0
    %661 = vmatpush1.bf16.msra.mxu0 0
    %662 = vmatprep.subr.bf16.mxu0 0
    %663 = vmatpush1.bf16.msra.mxu0 0
    %664 = vmatprep.subr.bf16.mxu0 0
    %665 = vmatpush1.bf16.msra.mxu0 0
    %666 = vmatprep.subr.bf16.mxu0 0
    %667 = vmatpush1.bf16.msra.mxu0 0
    %668 = vmatprep.subr.bf16.mxu0 0
    %669 = vmatpush1.bf16.msra.mxu0 0
    %670 = vmatprep.subr.bf16.mxu0 0
    %671 = vmatpush1.bf16.msra.mxu0 0
    %672 = vmatprep.subr.bf16.mxu0 0
    %673 = vmatpush1.bf16.msra.mxu0 0
    %674 = vmatprep.subr.bf16.mxu0 0
    %675 = vmatpush1.bf16.msra.mxu0 0
    %676 = vmatprep.subr.bf16.mxu0 0
    %677 = vmatpush1.bf16.msra.mxu0 0
    %678 = vmatprep.subr.bf16.mxu0 0
    %679 = vmatpush1.bf16.msra.mxu0 0
    %680 = vmatprep.subr.bf16.mxu0 0
    %681 = vmatpush1.bf16.msra.mxu0 0
    %682 = vmatprep.subr.bf16.mxu0 0
    %683 = vmatpush1.bf16.msra.mxu0 0
    %684 = vmatprep.mubr.bf16.mxu0 0
    %685 = vmatmul.mubr.bf16.gmra.mrb[0].mxu0 %v445
    %v686 = vpop.f32.mrb[0].mxu0
    %v687 = vadd.f32 0.0, %v686
    %v688 = vpop.f32.mrb[0].mxu0
    %v689 = vadd.f32 0.0, %v688
    %v690 = vpop.f32.mrb[0].mxu0
    %v691 = vpop.f32.mrb[0].mxu0
    %692 = vdwg.mxu0
    %693 = vmatprep.subr.bf16.mxu0 %v328
    %694 = vmatpush1.bf16.msra.mxu0 %v327
    %695 = vmatprep.subr.bf16.mxu0 %v360
    %696 = vmatpush1.bf16.msra.mxu0 %v359
    %697 = vmatprep.subr.bf16.mxu0 0
    %698 = vmatpush1.bf16.msra.mxu0 0
    %699 = vmatprep.subr.bf16.mxu0 0
    %700 = vmatpush1.bf16.msra.mxu0 0
    %701 = vmatprep.subr.bf16.mxu0 0
    %702 = vmatpush1.bf16.msra.mxu0 0
    %703 = vmatprep.subr.bf16.mxu0 0
    %704 = vmatpush1.bf16.msra.mxu0 0
    %705 = vmatprep.subr.bf16.mxu0 0
    %706 = vmatpush1.bf16.msra.mxu0 0
    %707 = vmatprep.subr.bf16.mxu0 0
    %708 = vmatpush1.bf16.msra.mxu0 0
    %709 = vmatprep.subr.bf16.mxu0 0
    %710 = vmatpush1.bf16.msra.mxu0 0
    %711 = vmatprep.subr.bf16.mxu0 0
    %712 = vmatpush1.bf16.msra.mxu0 0
    %713 = vmatprep.subr.bf16.mxu0 0
    %714 = vmatpush1.bf16.msra.mxu0 0
    %715 = vmatprep.subr.bf16.mxu0 0
    %716 = vmatpush1.bf16.msra.mxu0 0
    %717 = vmatprep.subr.bf16.mxu0 0
    %718 = vmatpush1.bf16.msra.mxu0 0
    %719 = vmatprep.subr.bf16.mxu0 0
    %720 = vmatpush1.bf16.msra.mxu0 0
    %721 = vmatprep.subr.bf16.mxu0 0
    %722 = vmatpush1.bf16.msra.mxu0 0
    %723 = vmatprep.subr.bf16.mxu0 0
    %724 = vmatpush1.bf16.msra.mxu0 0
    %725 = vmatprep.mubr.bf16.mxu0 0
    %726 = vmatmul.mubr.bf16.gmra.mrb[0].mxu0 %v445
    %v727 = vpop.f32.mrb[0].mxu0
    %v728 = vadd.f32 0.0, %v727
    %v729 = vpop.f32.mrb[0].mxu0
    %v730 = vadd.f32 0.0, %v729
    %v731 = vpop.f32.mrb[0].mxu0
    %v732 = vpop.f32.mrb[0].mxu0
    %733 = vdwg.mxu0
    %734 = vmatprep.subr.bf16.mxu0 %v330
    %735 = vmatpush1.bf16.msra.mxu0 %v329
    %736 = vmatprep.subr.bf16.mxu0 %v362
    %737 = vmatpush1.bf16.msra.mxu0 %v361
    %738 = vmatprep.subr.bf16.mxu0 0
    %739 = vmatpush1.bf16.msra.mxu0 0
    %740 = vmatprep.subr.bf16.mxu0 0
    %741 = vmatpush1.bf16.msra.mxu0 0
    %742 = vmatprep.subr.bf16.mxu0 0
    %743 = vmatpush1.bf16.msra.mxu0 0
    %744 = vmatprep.subr.bf16.mxu0 0
    %745 = vmatpush1.bf16.msra.mxu0 0
    %746 = vmatprep.subr.bf16.mxu0 0
    %747 = vmatpush1.bf16.msra.mxu0 0
    %748 = vmatprep.subr.bf16.mxu0 0
    %749 = vmatpush1.bf16.msra.mxu0 0
    %750 = vmatprep.subr.bf16.mxu0 0
    %751 = vmatpush1.bf16.msra.mxu0 0
    %752 = vmatprep.subr.bf16.mxu0 0
    %753 = vmatpush1.bf16.msra.mxu0 0
    %754 = vmatprep.subr.bf16.mxu0 0
    %755 = vmatpush1.bf16.msra.mxu0 0
    %756 = vmatprep.subr.bf16.mxu0 0
    %757 = vmatpush1.bf16.msra.mxu0 0
    %758 = vmatprep.subr.bf16.mxu0 0
    %759 = vmatpush1.bf16.msra.mxu0 0
    %760 = vmatprep.subr.bf16.mxu0 0
    %761 = vmatpush1.bf16.msra.mxu0 0
    %762 = vmatprep.subr.bf16.mxu0 0
    %763 = vmatpush1.bf16.msra.mxu0 0
    %764 = vmatprep.subr.bf16.mxu0 0
    %765 = vmatpush1.bf16.msra.mxu0 0
    %766 = vmatprep.mubr.bf16.mxu0 0
    %767 = vmatmul.mubr.bf16.gmra.mrb[0].mxu0 %v445
    %v768 = vpop.f32.mrb[0].mxu0
    %v769 = vadd.f32 0.0, %v768
    %v770 = vpop.f32.mrb[0].mxu0
    %v771 = vadd.f32 0.0, %v770
    %v772 = vpop.f32.mrb[0].mxu0
    %v773 = vpop.f32.mrb[0].mxu0
    %774 = vdwg.mxu0
    %775 = vmatprep.subr.bf16.mxu0 %v332
    %776 = vmatpush1.bf16.msra.mxu0 %v331
    %777 = vmatprep.subr.bf16.mxu0 %v364
    %778 = vmatpush1.bf16.msra.mxu0 %v363
    %779 = vmatprep.subr.bf16.mxu0 0
    %780 = vmatpush1.bf16.msra.mxu0 0
    %781 = vmatprep.subr.bf16.mxu0 0
    %782 = vmatpush1.bf16.msra.mxu0 0
    %783 = vmatprep.subr.bf16.mxu0 0
    %784 = vmatpush1.bf16.msra.mxu0 0
    %785 = vmatprep.subr.bf16.mxu0 0
    %786 = vmatpush1.bf16.msra.mxu0 0
    %787 = vmatprep.subr.bf16.mxu0 0
    %788 = vmatpush1.bf16.msra.mxu0 0
    %789 = vmatprep.subr.bf16.mxu0 0
    %790 = vmatpush1.bf16.msra.mxu0 0
    %791 = vmatprep.subr.bf16.mxu0 0
    %792 = vmatpush1.bf16.msra.mxu0 0
    %793 = vmatprep.subr.bf16.mxu0 0
    %794 = vmatpush1.bf16.msra.mxu0 0
    %795 = vmatprep.subr.bf16.mxu0 0
    %796 = vmatpush1.bf16.msra.mxu0 0
    %797 = vmatprep.subr.bf16.mxu0 0
    %798 = vmatpush1.bf16.msra.mxu0 0
    %799 = vmatprep.subr.bf16.mxu0 0
    %800 = vmatpush1.bf16.msra.mxu0 0
    %801 = vmatprep.subr.bf16.mxu0 0
    %802 = vmatpush1.bf16.msra.mxu0 0
    %803 = vmatprep.subr.bf16.mxu0 0
    %804 = vmatpush1.bf16.msra.mxu0 0
    %805 = vmatprep.subr.bf16.mxu0 0
    %806 = vmatpush1.bf16.msra.mxu0 0
    %807 = vmatprep.mubr.bf16.mxu0 0
    %808 = vmatmul.mubr.bf16.gmra.mrb[0].mxu0 %v445
    %v809 = vpop.f32.mrb[0].mxu0
    %v810 = vadd.f32 0.0, %v809
    %v811 = vpop.f32.mrb[0].mxu0
    %v812 = vadd.f32 0.0, %v811
    %v813 = vpop.f32.mrb[0].mxu0
    %v814 = vpop.f32.mrb[0].mxu0
    %815 = vdwg.mxu0
    %816 = vmatprep.subr.bf16.mxu0 %v334
    %817 = vmatpush1.bf16.msra.mxu0 %v333
    %818 = vmatprep.subr.bf16.mxu0 %v366
    %819 = vmatpush1.bf16.msra.mxu0 %v365
    %820 = vmatprep.subr.bf16.mxu0 0
    %821 = vmatpush1.bf16.msra.mxu0 0
    %822 = vmatprep.subr.bf16.mxu0 0
    %823 = vmatpush1.bf16.msra.mxu0 0
    %824 = vmatprep.subr.bf16.mxu0 0
    %825 = vmatpush1.bf16.msra.mxu0 0
    %826 = vmatprep.subr.bf16.mxu0 0
    %827 = vmatpush1.bf16.msra.mxu0 0
    %828 = vmatprep.subr.bf16.mxu0 0
    %829 = vmatpush1.bf16.msra.mxu0 0
    %830 = vmatprep.subr.bf16.mxu0 0
    %831 = vmatpush1.bf16.msra.mxu0 0
    %832 = vmatprep.subr.bf16.mxu0 0
    %833 = vmatpush1.bf16.msra.mxu0 0
    %834 = vmatprep.subr.bf16.mxu0 0
    %835 = vmatpush1.bf16.msra.mxu0 0
    %836 = vmatprep.subr.bf16.mxu0 0
    %837 = vmatpush1.bf16.msra.mxu0 0
    %838 = vmatprep.subr.bf16.mxu0 0
    %839 = vmatpush1.bf16.msra.mxu0 0
    %840 = vmatprep.subr.bf16.mxu0 0
    %841 = vmatpush1.bf16.msra.mxu0 0
    %842 = vmatprep.subr.bf16.mxu0 0
    %843 = vmatpush1.bf16.msra.mxu0 0
    %844 = vmatprep.subr.bf16.mxu0 0
    %845 = vmatpush1.bf16.msra.mxu0 0
    %846 = vmatprep.subr.bf16.mxu0 0
    %847 = vmatpush1.bf16.msra.mxu0 0
    %848 = vmatprep.mubr.bf16.mxu0 0
    %849 = vmatmul.mubr.bf16.gmra.mrb[0].mxu0 %v445
    %v850 = vpop.f32.mrb[0].mxu0
    %v851 = vadd.f32 0.0, %v850
    %v852 = vpop.f32.mrb[0].mxu0
    %v853 = vadd.f32 0.0, %v852
    %v854 = vpop.f32.mrb[0].mxu0
    %v855 = vpop.f32.mrb[0].mxu0
    %856 = vdwg.mxu0
    %857 = vmatprep.subr.bf16.mxu0 %v336
    %858 = vmatpush1.bf16.msra.mxu0 %v335
    %859 = vmatprep.subr.bf16.mxu0 %v368
    %860 = vmatpush1.bf16.msra.mxu0 %v367
    %861 = vmatprep.subr.bf16.mxu0 0
    %862 = vmatpush1.bf16.msra.mxu0 0
    %863 = vmatprep.subr.bf16.mxu0 0
    %864 = vmatpush1.bf16.msra.mxu0 0
    %865 = vmatprep.subr.bf16.mxu0 0
    %866 = vmatpush1.bf16.msra.mxu0 0
    %867 = vmatprep.subr.bf16.mxu0 0
    %868 = vmatpush1.bf16.msra.mxu0 0
    %869 = vmatprep.subr.bf16.mxu0 0
    %870 = vmatpush1.bf16.msra.mxu0 0
    %871 = vmatprep.subr.bf16.mxu0 0
    %872 = vmatpush1.bf16.msra.mxu0 0
    %873 = vmatprep.subr.bf16.mxu0 0
    %874 = vmatpush1.bf16.msra.mxu0 0
    %875 = vmatprep.subr.bf16.mxu0 0
    %876 = vmatpush1.bf16.msra.mxu0 0
    %877 = vmatprep.subr.bf16.mxu0 0
    %878 = vmatpush1.bf16.msra.mxu0 0
    %879 = vmatprep.subr.bf16.mxu0 0
    %880 = vmatpush1.bf16.msra.mxu0 0
    %881 = vmatprep.subr.bf16.mxu0 0
    %882 = vmatpush1.bf16.msra.mxu0 0
    %883 = vmatprep.subr.bf16.mxu0 0
    %884 = vmatpush1.bf16.msra.mxu0 0
    %885 = vmatprep.subr.bf16.mxu0 0
    %886 = vmatpush1.bf16.msra.mxu0 0
    %887 = vmatprep.subr.bf16.mxu0 0
    %888 = vmatpush1.bf16.msra.mxu0 0
    %889 = vmatprep.mubr.bf16.mxu0 0
    %890 = vmatmul.mubr.bf16.gmra.mrb[0].mxu0 %v445
    %v891 = vpop.f32.mrb[0].mxu0
    %v892 = vadd.f32 0.0, %v891
    %v893 = vpop.f32.mrb[0].mxu0
    %v894 = vadd.f32 0.0, %v893
    %v895 = vpop.f32.mrb[0].mxu0
    %v896 = vpop.f32.mrb[0].mxu0
    %897 = vdwg.mxu0
    %898 = vmatprep.subr.bf16.mxu0 %v338
    %899 = vmatpush1.bf16.msra.mxu0 %v337
    %900 = vmatprep.subr.bf16.mxu0 %v370
    %901 = vmatpush1.bf16.msra.mxu0 %v369
    %902 = vmatprep.subr.bf16.mxu0 0
    %903 = vmatpush1.bf16.msra.mxu0 0
    %904 = vmatprep.subr.bf16.mxu0 0
    %905 = vmatpush1.bf16.msra.mxu0 0
    %906 = vmatprep.subr.bf16.mxu0 0
    %907 = vmatpush1.bf16.msra.mxu0 0
    %908 = vmatprep.subr.bf16.mxu0 0
    %909 = vmatpush1.bf16.msra.mxu0 0
    %910 = vmatprep.subr.bf16.mxu0 0
    %911 = vmatpush1.bf16.msra.mxu0 0
    %912 = vmatprep.subr.bf16.mxu0 0
    %913 = vmatpush1.bf16.msra.mxu0 0
    %914 = vmatprep.subr.bf16.mxu0 0
    %915 = vmatpush1.bf16.msra.mxu0 0
    %916 = vmatprep.subr.bf16.mxu0 0
    %917 = vmatpush1.bf16.msra.mxu0 0
    %918 = vmatprep.subr.bf16.mxu0 0
    %919 = vmatpush1.bf16.msra.mxu0 0
    %920 = vmatprep.subr.bf16.mxu0 0
    %921 = vmatpush1.bf16.msra.mxu0 0
    %922 = vmatprep.subr.bf16.mxu0 0
    %923 = vmatpush1.bf16.msra.mxu0 0
    %924 = vmatprep.subr.bf16.mxu0 0
    %925 = vmatpush1.bf16.msra.mxu0 0
    %926 = vmatprep.subr.bf16.mxu0 0
    %927 = vmatpush1.bf16.msra.mxu0 0
    %928 = vmatprep.subr.bf16.mxu0 0
    %929 = vmatpush1.bf16.msra.mxu0 0
    %930 = vmatprep.mubr.bf16.mxu0 0
    %931 = vmatmul.mubr.bf16.gmra.mrb[0].mxu0 %v445
    %v932 = vpop.f32.mrb[0].mxu0
    %v933 = vadd.f32 0.0, %v932
    %v934 = vpop.f32.mrb[0].mxu0
    %v935 = vadd.f32 0.0, %v934
    %v936 = vpop.f32.mrb[0].mxu0
    %v937 = vpop.f32.mrb[0].mxu0
    %938 = vdwg.mxu0
    %939 = vmatprep.subr.bf16.mxu0 %v340
    %940 = vmatpush1.bf16.msra.mxu0 %v339
    %941 = vmatprep.subr.bf16.mxu0 %v372
    %942 = vmatpush1.bf16.msra.mxu0 %v371
    %943 = vmatprep.subr.bf16.mxu0 0
    %944 = vmatpush1.bf16.msra.mxu0 0
    %945 = vmatprep.subr.bf16.mxu0 0
    %946 = vmatpush1.bf16.msra.mxu0 0
    %947 = vmatprep.subr.bf16.mxu0 0
    %948 = vmatpush1.bf16.msra.mxu0 0
    %949 = vmatprep.subr.bf16.mxu0 0
    %950 = vmatpush1.bf16.msra.mxu0 0
    %951 = vmatprep.subr.bf16.mxu0 0
    %952 = vmatpush1.bf16.msra.mxu0 0
    %953 = vmatprep.subr.bf16.mxu0 0
    %954 = vmatpush1.bf16.msra.mxu0 0
    %955 = vmatprep.subr.bf16.mxu0 0
    %956 = vmatpush1.bf16.msra.mxu0 0
    %957 = vmatprep.subr.bf16.mxu0 0
    %958 = vmatpush1.bf16.msra.mxu0 0
    %959 = vmatprep.subr.bf16.mxu0 0
    %960 = vmatpush1.bf16.msra.mxu0 0
    %961 = vmatprep.subr.bf16.mxu0 0
    %962 = vmatpush1.bf16.msra.mxu0 0
    %963 = vmatprep.subr.bf16.mxu0 0
    %964 = vmatpush1.bf16.msra.mxu0 0
    %965 = vmatprep.subr.bf16.mxu0 0
    %966 = vmatpush1.bf16.msra.mxu0 0
    %967 = vmatprep.subr.bf16.mxu0 0
    %968 = vmatpush1.bf16.msra.mxu0 0
    %969 = vmatprep.subr.bf16.mxu0 0
    %970 = vmatpush1.bf16.msra.mxu0 0
    %971 = vmatprep.mubr.bf16.mxu0 0
    %972 = vmatmul.mubr.bf16.gmra.mrb[0].mxu0 %v445
    %v973 = vpop.f32.mrb[0].mxu0
    %v974 = vadd.f32 0.0, %v973
    %v975 = vpop.f32.mrb[0].mxu0
    %v976 = vadd.f32 0.0, %v975
    %v977 = vpop.f32.mrb[0].mxu0
    %v978 = vpop.f32.mrb[0].mxu0
    %979 = vdwg.mxu0
    %980 = vmatprep.subr.bf16.mxu0 %v342
    %981 = vmatpush1.bf16.msra.mxu0 %v341
    %982 = vmatprep.subr.bf16.mxu0 %v374
    %983 = vmatpush1.bf16.msra.mxu0 %v373
    %984 = vmatprep.subr.bf16.mxu0 0
    %985 = vmatpush1.bf16.msra.mxu0 0
    %986 = vmatprep.subr.bf16.mxu0 0
    %987 = vmatpush1.bf16.msra.mxu0 0
    %988 = vmatprep.subr.bf16.mxu0 0
    %989 = vmatpush1.bf16.msra.mxu0 0
    %990 = vmatprep.subr.bf16.mxu0 0
    %991 = vmatpush1.bf16.msra.mxu0 0
    %992 = vmatprep.subr.bf16.mxu0 0
    %993 = vmatpush1.bf16.msra.mxu0 0
    %994 = vmatprep.subr.bf16.mxu0 0
    %995 = vmatpush1.bf16.msra.mxu0 0
    %996 = vmatprep.subr.bf16.mxu0 0
    %997 = vmatpush1.bf16.msra.mxu0 0
    %998 = vmatprep.subr.bf16.mxu0 0
    %999 = vmatpush1.bf16.msra.mxu0 0
    %1000 = vmatprep.subr.bf16.mxu0 0
    %1001 = vmatpush1.bf16.msra.mxu0 0
    %1002 = vmatprep.subr.bf16.mxu0 0
    %1003 = vmatpush1.bf16.msra.mxu0 0
    %1004 = vmatprep.subr.bf16.mxu0 0
    %1005 = vmatpush1.bf16.msra.mxu0 0
    %1006 = vmatprep.subr.bf16.mxu0 0
    %1007 = vmatpush1.bf16.msra.mxu0 0
    %1008 = vmatprep.subr.bf16.mxu0 0
    %1009 = vmatpush1.bf16.msra.mxu0 0
    %1010 = vmatprep.subr.bf16.mxu0 0
    %1011 = vmatpush1.bf16.msra.mxu0 0
    %1012 = vmatprep.mubr.bf16.mxu0 0
    %1013 = vmatmul.mubr.bf16.gmra.mrb[0].mxu0 %v445
    %v1014 = vpop.f32.mrb[0].mxu0
    %v1015 = vadd.f32 0.0, %v1014
    %v1016 = vpop.f32.mrb[0].mxu0
    %v1017 = vadd.f32 0.0, %v1016
    %v1018 = vpop.f32.mrb[0].mxu0
    %v1019 = vpop.f32.mrb[0].mxu0
    %1020 = vdwg.mxu0
    %1021 = vmatprep.subr.bf16.mxu0 %v344
    %1022 = vmatpush1.bf16.msra.mxu0 %v343
    %1023 = vmatprep.subr.bf16.mxu0 %v376
    %1024 = vmatpush1.bf16.msra.mxu0 %v375
    %1025 = vmatprep.subr.bf16.mxu0 0
    %1026 = vmatpush1.bf16.msra.mxu0 0
    %1027 = vmatprep.subr.bf16.mxu0 0
    %1028 = vmatpush1.bf16.msra.mxu0 0
    %1029 = vmatprep.subr.bf16.mxu0 0
    %1030 = vmatpush1.bf16.msra.mxu0 0
    %1031 = vmatprep.subr.bf16.mxu0 0
    %1032 = vmatpush1.bf16.msra.mxu0 0
    %1033 = vmatprep.subr.bf16.mxu0 0
    %1034 = vmatpush1.bf16.msra.mxu0 0
    %1035 = vmatprep.subr.bf16.mxu0 0
    %1036 = vmatpush1.bf16.msra.mxu0 0
    %1037 = vmatprep.subr.bf16.mxu0 0
    %1038 = vmatpush1.bf16.msra.mxu0 0
    %1039 = vmatprep.subr.bf16.mxu0 0
    %1040 = vmatpush1.bf16.msra.mxu0 0
    %1041 = vmatprep.subr.bf16.mxu0 0
    %1042 = vmatpush1.bf16.msra.mxu0 0
    %1043 = vmatprep.subr.bf16.mxu0 0
    %1044 = vmatpush1.bf16.msra.mxu0 0
    %1045 = vmatprep.subr.bf16.mxu0 0
    %1046 = vmatpush1.bf16.msra.mxu0 0
    %1047 = vmatprep.subr.bf16.mxu0 0
    %1048 = vmatpush1.bf16.msra.mxu0 0
    %1049 = vmatprep.subr.bf16.mxu0 0
    %1050 = vmatpush1.bf16.msra.mxu0 0
    %1051 = vmatprep.subr.bf16.mxu0 0
    %1052 = vmatpush1.bf16.msra.mxu0 0
    %1053 = vmatprep.mubr.bf16.mxu0 0
    %1054 = vmatmul.mubr.bf16.gmra.mrb[0].mxu0 %v445
    %v1055 = vpop.f32.mrb[0].mxu0
    %v1056 = vadd.f32 0.0, %v1055
    %v1057 = vpop.f32.mrb[0].mxu0
    %v1058 = vadd.f32 0.0, %v1057
    %v1059 = vpop.f32.mrb[0].mxu0
    %v1060 = vpop.f32.mrb[0].mxu0
    %1061 = vdwg.mxu0
    %1062 = vmatprep.subr.bf16.mxu0 %v346
    %1063 = vmatpush1.bf16.msra.mxu0 %v345
    %1064 = vmatprep.subr.bf16.mxu0 %v378
    %1065 = vmatpush1.bf16.msra.mxu0 %v377
    %1066 = vmatprep.subr.bf16.mxu0 0
    %1067 = vmatpush1.bf16.msra.mxu0 0
    %1068 = vmatprep.subr.bf16.mxu0 0
    %1069 = vmatpush1.bf16.msra.mxu0 0
    %1070 = vmatprep.subr.bf16.mxu0 0
    %1071 = vmatpush1.bf16.msra.mxu0 0
    %1072 = vmatprep.subr.bf16.mxu0 0
    %1073 = vmatpush1.bf16.msra.mxu0 0
    %1074 = vmatprep.subr.bf16.mxu0 0
    %1075 = vmatpush1.bf16.msra.mxu0 0
    %1076 = vmatprep.subr.bf16.mxu0 0
    %1077 = vmatpush1.bf16.msra.mxu0 0
    %1078 = vmatprep.subr.bf16.mxu0 0
    %1079 = vmatpush1.bf16.msra.mxu0 0
    %1080 = vmatprep.subr.bf16.mxu0 0
    %1081 = vmatpush1.bf16.msra.mxu0 0
    %1082 = vmatprep.subr.bf16.mxu0 0
    %1083 = vmatpush1.bf16.msra.mxu0 0
    %1084 = vmatprep.subr.bf16.mxu0 0
    %1085 = vmatpush1.bf16.msra.mxu0 0
    %1086 = vmatprep.subr.bf16.mxu0 0
    %1087 = vmatpush1.bf16.msra.mxu0 0
    %1088 = vmatprep.subr.bf16.mxu0 0
    %1089 = vmatpush1.bf16.msra.mxu0 0
    %1090 = vmatprep.subr.bf16.mxu0 0
    %1091 = vmatpush1.bf16.msra.mxu0 0
    %1092 = vmatprep.subr.bf16.mxu0 0
    %1093 = vmatpush1.bf16.msra.mxu0 0
    %1094 = vmatprep.mubr.bf16.mxu0 0
    %1095 = vmatmul.mubr.bf16.gmra.mrb[0].mxu0 %v445
    %v1096 = vpop.f32.mrb[0].mxu0
    %v1097 = vadd.f32 0.0, %v1096
    %v1098 = vpop.f32.mrb[0].mxu0
    %v1099 = vadd.f32 0.0, %v1098
    %v1100 = vpop.f32.mrb[0].mxu0
    %v1101 = vpop.f32.mrb[0].mxu0
    %1102 = vdwg.mxu0
    %v1103 = vld [vmem:[%s3] sm:$0x1]
    %v1105 = vlaneseq
    %v1106 = vshrl.u32 %v1105, 7
    %v1107 = vsub.s32 0, %v1106
    %v1108 = vrot.slane %v1103, %v1107
    %1111 = vset.pattern.permute.xlu0 0
    %1112 = vperm.xlu0 %1111, %v58
    %v1113 = vpop.permute.xlu0 %1112
    %v1115 = vmul.f32 %v1113, %v482
    %v1116 = vadd.f32 %v1108, %v1115
    %1117 = vset.pattern.permute.xlu0 1
    %1118 = vperm.xlu0 %1117, %v58
    %v1119 = vpop.permute.xlu0 %1118
    %v1121 = vmul.f32 %v1119, %v484
    %v1122 = vadd.f32 %v1116, %v1121
    %1123 = vset.pattern.permute.xlu0 2
    %1124 = vperm.xlu0 %1123, %v58
    %v1125 = vpop.permute.xlu0 %1124
    %v1127 = vmul.f32 %v1125, %v523
    %v1128 = vadd.f32 %v1122, %v1127
    %1129 = vset.pattern.permute.xlu0 3
    %1130 = vperm.xlu0 %1129, %v58
    %v1131 = vpop.permute.xlu0 %1130
    %v1133 = vmul.f32 %v1131, %v525
    %v1134 = vadd.f32 %v1128, %v1133
    %1135 = vset.pattern.permute.xlu0 4
    %1136 = vperm.xlu0 %1135, %v58
    %v1137 = vpop.permute.xlu0 %1136
    %v1139 = vmul.f32 %v1137, %v564
    %v1140 = vadd.f32 %v1134, %v1139
    %1141 = vset.pattern.permute.xlu0 5
    %1142 = vperm.xlu0 %1141, %v58
    %v1143 = vpop.permute.xlu0 %1142
    %v1145 = vmul.f32 %v1143, %v566
    %v1146 = vadd.f32 %v1140, %v1145
    %1147 = vset.pattern.permute.xlu0 6
    %1148 = vperm.xlu0 %1147, %v58
    %v1149 = vpop.permute.xlu0 %1148
    %v1151 = vmul.f32 %v1149, %v605
    %v1152 = vadd.f32 %v1146, %v1151
    %1153 = vset.pattern.permute.xlu0 7
    %1154 = vperm.xlu0 %1153, %v58
    %v1155 = vpop.permute.xlu0 %1154
    %v1157 = vmul.f32 %v1155, %v607
    %v1158 = vadd.f32 %v1152, %v1157
    %1159 = vset.pattern.permute.xlu0 8
    %1160 = vperm.xlu0 %1159, %v58
    %v1161 = vpop.permute.xlu0 %1160
    %v1163 = vmul.f32 %v1161, %v646
    %v1164 = vadd.f32 %v1158, %v1163
    %1165 = vset.pattern.permute.xlu0 9
    %1166 = vperm.xlu0 %1165, %v58
    %v1167 = vpop.permute.xlu0 %1166
    %v1169 = vmul.f32 %v1167, %v648
    %v1170 = vadd.f32 %v1164, %v1169
    %1171 = vset.pattern.permute.xlu0 10
    %1172 = vperm.xlu0 %1171, %v58
    %v1173 = vpop.permute.xlu0 %1172
    %v1175 = vmul.f32 %v1173, %v687
    %v1176 = vadd.f32 %v1170, %v1175
    %1177 = vset.pattern.permute.xlu0 11
    %1178 = vperm.xlu0 %1177, %v58
    %v1179 = vpop.permute.xlu0 %1178
    %v1181 = vmul.f32 %v1179, %v689
    %v1182 = vadd.f32 %v1176, %v1181
    %1183 = vset.pattern.permute.xlu0 12
    %1184 = vperm.xlu0 %1183, %v58
    %v1185 = vpop.permute.xlu0 %1184
    %v1187 = vmul.f32 %v1185, %v728
    %v1188 = vadd.f32 %v1182, %v1187
    %1189 = vset.pattern.permute.xlu0 13
    %1190 = vperm.xlu0 %1189, %v58
    %v1191 = vpop.permute.xlu0 %1190
    %v1193 = vmul.f32 %v1191, %v730
    %v1194 = vadd.f32 %v1188, %v1193
    %1195 = vset.pattern.permute.xlu0 14
    %1196 = vperm.xlu0 %1195, %v58
    %v1197 = vpop.permute.xlu0 %1196
    %v1199 = vmul.f32 %v1197, %v769
    %v1200 = vadd.f32 %v1194, %v1199
    %1201 = vset.pattern.permute.xlu0 15
    %1202 = vperm.xlu0 %1201, %v58
    %v1203 = vpop.permute.xlu0 %1202
    %v1205 = vmul.f32 %v1203, %v771
    %v1206 = vadd.f32 %v1200, %v1205
    %1207 = vset.pattern.permute.xlu0 16
    %1208 = vperm.xlu0 %1207, %v58
    %v1209 = vpop.permute.xlu0 %1208
    %v1211 = vmul.f32 %v1209, %v810
    %v1212 = vadd.f32 %v1206, %v1211
    %1213 = vset.pattern.permute.xlu0 17
    %1214 = vperm.xlu0 %1213, %v58
    %v1215 = vpop.permute.xlu0 %1214
    %v1217 = vmul.f32 %v1215, %v812
    %v1218 = vadd.f32 %v1212, %v1217
    %1219 = vset.pattern.permute.xlu0 18
    %1220 = vperm.xlu0 %1219, %v58
    %v1221 = vpop.permute.xlu0 %1220
    %v1223 = vmul.f32 %v1221, %v851
    %v1224 = vadd.f32 %v1218, %v1223
    %1225 = vset.pattern.permute.xlu0 19
    %1226 = vperm.xlu0 %1225, %v58
    %v1227 = vpop.permute.xlu0 %1226
    %v1229 = vmul.f32 %v1227, %v853
    %v1230 = vadd.f32 %v1224, %v1229
    %1231 = vset.pattern.permute.xlu0 20
    %1232 = vperm.xlu0 %1231, %v58
    %v1233 = vpop.permute.xlu0 %1232
    %v1235 = vmul.f32 %v1233, %v892
    %v1236 = vadd.f32 %v1230, %v1235
    %1237 = vset.pattern.permute.xlu0 21
    %1238 = vperm.xlu0 %1237, %v58
    %v1239 = vpop.permute.xlu0 %1238
    %v1241 = vmul.f32 %v1239, %v894
    %v1242 = vadd.f32 %v1236, %v1241
    %1243 = vset.pattern.permute.xlu0 22
    %1244 = vperm.xlu0 %1243, %v58
    %v1245 = vpop.permute.xlu0 %1244
    %v1247 = vmul.f32 %v1245, %v933
    %v1248 = vadd.f32 %v1242, %v1247
    %1249 = vset.pattern.permute.xlu0 23
    %1250 = vperm.xlu0 %1249, %v58
    %v1251 = vpop.permute.xlu0 %1250
    %v1253 = vmul.f32 %v1251, %v935
    %v1254 = vadd.f32 %v1248, %v1253
    %1255 = vset.pattern.permute.xlu0 24
    %1256 = vperm.xlu0 %1255, %v58
    %v1257 = vpop.permute.xlu0 %1256
    %v1259 = vmul.f32 %v1257, %v974
    %v1260 = vadd.f32 %v1254, %v1259
    %1261 = vset.pattern.permute.xlu0 25
    %1262 = vperm.xlu0 %1261, %v58
    %v1263 = vpop.permute.xlu0 %1262
    %v1265 = vmul.f32 %v1263, %v976
    %v1266 = vadd.f32 %v1260, %v1265
    %1267 = vset.pattern.permute.xlu0 26
    %1268 = vperm.xlu0 %1267, %v58
    %v1269 = vpop.permute.xlu0 %1268
    %v1271 = vmul.f32 %v1269, %v1015
    %v1272 = vadd.f32 %v1266, %v1271
    %1273 = vset.pattern.permute.xlu0 27
    %1274 = vperm.xlu0 %1273, %v58
    %v1275 = vpop.permute.xlu0 %1274
    %v1277 = vmul.f32 %v1275, %v1017
    %v1278 = vadd.f32 %v1272, %v1277
    %1279 = vset.pattern.permute.xlu0 28
    %1280 = vperm.xlu0 %1279, %v58
    %v1281 = vpop.permute.xlu0 %1280
    %v1283 = vmul.f32 %v1281, %v1056
    %v1284 = vadd.f32 %v1278, %v1283
    %1285 = vset.pattern.permute.xlu0 29
    %1286 = vperm.xlu0 %1285, %v58
    %v1287 = vpop.permute.xlu0 %1286
    %v1289 = vmul.f32 %v1287, %v1058
    %v1290 = vadd.f32 %v1284, %v1289
    %1291 = vset.pattern.permute.xlu0 30
    %1292 = vperm.xlu0 %1291, %v58
    %v1293 = vpop.permute.xlu0 %1292
    %v1295 = vmul.f32 %v1293, %v1097
    %v1296 = vadd.f32 %v1290, %v1295
    %1297 = vset.pattern.permute.xlu0 31
    %1298 = vperm.xlu0 %1297, %v58
    %v1299 = vpop.permute.xlu0 %1298
    %v1301 = vmul.f32 %v1299, %v1099
    %v1302 = vadd.f32 %v1296, %v1301
    %1303 = vst [vmem:[#allocation8] sm:$0xff] %v1302
    // Predicated region
    $region30: #{tpu_custom_call.1} parent=1 // pred_check
      _
    $region31: #{tpu_custom_call.1} parent=1 // pred_check_branch
      %1305 = sbr.rel (0) target = $region33
    $region32: #{tpu_custom_call.1} parent=1 // pred_region
      %s1307 = ssub.s32 128, 128
      %1308 = vsyncadd [#allocation4], %s1307
      %s1310 = sshll.u32 [#allocation8], 4
      %s1311 = int_to_ptr.vmem [resolvable:$true] %s1310
      %1313 = dma.vmem_to_hbm [thread:$0]  %s1311, 128, %s4, [#allocation4]
    $region33: #{tpu_custom_call.1} parent=1 // pred_fallthru
      _
    // Predicated region
    $region34: #{tpu_custom_call.1} parent=1 // pred_check
      _
    $region35: #{tpu_custom_call.1} parent=1 // pred_check_branch
      %1315 = sbr.rel (0) target = $region37
    $region36: #{tpu_custom_call.1} parent=1 // pred_region
      %1316 = dma.done [#allocation4], 128
    $region37: #{tpu_custom_call.1} parent=1 // pred_fallthru
      _
    %1317 = vsyncpa [#allocation3], 1
    %1318 = vsyncpa [#allocation6], 1
    %1319 = vsyncpa [#allocation4], 1

</llo_original>
